<compile_context>
chip_gen: v6e
topology: v6e:2x2x1
jax: 0.10.0
libtpu: 0.0.40
codegen_flags: <defaults>
</compile_context>

<pallas_src>
import functools

import jax
import jax.numpy as jnp
from jax.experimental import pallas as pl
from jax.experimental.pallas import tpu as pltpu

IN_FEATURES = 784          # 28 * 28
IN_PAD = 896               # 7 * 128: lane-dense padding of 784
LATENT = 10                # mu / sigma width
LAT_PAD = 128              # lane-dense padding of the latent dim
H1, H2 = 256, 64           # encoder hidden sizes (decoder mirrors them)
TILE_B_MAX = 256           # batch tile: fills the MXU M-dim, fits v7x VMEM


def _round_up(n, m):
    return ((n + m - 1) // m) * m


def _vae_kernel(x_ref, eps_ref,
                w1_ref, b1_ref, w2_ref, b2_ref,
                w3m_ref, b3m_ref, w3s_ref, b3s_ref,
                w4_ref, b4_ref, w5_ref, b5_ref, w6_ref, b6_ref,
                out_ref, kld_ref,
                *, tile_b, batch_size):
    f32, bf16 = jnp.float32, jnp.bfloat16

    # ---- encoder: Linear(784,256)+ReLU, Linear(256,64)+ReLU ----------------
    x = x_ref[...]                                        # (tile_b, 896) bf16
    h1 = jnp.maximum(
        jnp.dot(x, w1_ref[...], preferred_element_type=f32) + b1_ref[...], 0.0)
    h2 = jnp.maximum(
        jnp.dot(h1.astype(bf16), w2_ref[...], preferred_element_type=f32)
        + b2_ref[...], 0.0)
    h2b = h2.astype(bf16)

    # ---- third encoder layer as two lane-dense heads (mu / sigma) + ReLU ---
    mu = jnp.maximum(
        jnp.dot(h2b, w3m_ref[...], preferred_element_type=f32) + b3m_ref[...],
        0.0)                                              # (tile_b, 128) f32
    sigma = jnp.maximum(
        jnp.dot(h2b, w3s_ref[...], preferred_element_type=f32) + b3s_ref[...],
        0.0)

    # ---- reparameterization: z = mu + sigma * eps (f32 elementwise) --------
    z = mu + sigma * eps_ref[...]

    # ---- decoder: Linear(10,64)+ReLU, Linear(64,256)+ReLU,
    #               Linear(256,784)+Sigmoid ---------------------------------
    d1 = jnp.maximum(
        jnp.dot(z.astype(bf16), w4_ref[...], preferred_element_type=f32)
        + b4_ref[...], 0.0)
    d2 = jnp.maximum(
        jnp.dot(d1.astype(bf16), w5_ref[...], preferred_element_type=f32)
        + b5_ref[...], 0.0)
    logits = (jnp.dot(d2.astype(bf16), w6_ref[...], preferred_element_type=f32)
              + b6_ref[...])
    out_ref[...] = jax.nn.sigmoid(logits)                 # (tile_b, 896) f32

    # ---- masked KLD lane-partials for this batch tile ----------------------
    # total KLD = 0.5 * sum(mu^2 + sigma^2 - log(1e-8 + sigma^2) - 1) / (B*784)
    # (cross-tile sum and normalization happen in the wrapper).
    row = jax.lax.broadcasted_iota(jnp.int32, (tile_b, LAT_PAD), 0)
    col = jax.lax.broadcasted_iota(jnp.int32, (tile_b, LAT_PAD), 1)
    global_row = row + pl.program_id(0) * tile_b
    valid = (global_row < batch_size) & (col < LATENT)
    sig2 = sigma * sigma
    terms = mu * mu + sig2 - jnp.log(1e-8 + sig2) - 1.0
    kld_ref[0] = jnp.sum(jnp.where(valid, terms, 0.0), axis=0, keepdims=True)


def init_linear(key, fan_in, fan_out):
    """nn.Linear-style init: U(-1/sqrt(fan_in), 1/sqrt(fan_in)).

    Weight stored (fan_in, fan_out) so the kernel computes x @ W + b;
    bias stored (1, fan_out) for clean 2-D broadcasting.
    """
    kw, kb = jax.random.split(key)
    bound = 1.0 / (fan_in ** 0.5)
    w = jax.random.uniform(kw, (fan_in, fan_out), jnp.float32, -bound, bound)
    b = jax.random.uniform(kb, (1, fan_out), jnp.float32, -bound, bound)
    return w, b


def init_vae_params(key):
    dims = [(IN_FEATURES, H1), (H1, H2), (H2, 2 * LATENT),
            (LATENT, H2), (H2, H1), (H1, IN_FEATURES)]
    keys = jax.random.split(key, len(dims))
    params = []
    for k, (fi, fo) in zip(keys, dims):
        params.extend(init_linear(k, fi, fo))
    return tuple(params)


def prepare_params(params):
    """Pad to lane-dense shapes, split w3 into mu/sigma heads, and cast the
    matmul weights to bf16 (biases stay f32: added after f32 accumulation)."""
    w1, b1, w2, b2, w3, b3, w4, b4, w5, b5, w6, b6 = params

    def pad2(a, rows, cols):
        r, c = a.shape
        return jnp.pad(a, ((0, rows - r), (0, cols - c)))

    bf16 = jnp.bfloat16
    w1p = pad2(w1, IN_PAD, H1).astype(bf16)                 # (896, 256)
    w3m = pad2(w3[:, :LATENT], H2, LAT_PAD).astype(bf16)    # (64, 128)
    w3s = pad2(w3[:, LATENT:], H2, LAT_PAD).astype(bf16)    # (64, 128)
    b3m = pad2(b3[:, :LATENT], 1, LAT_PAD)                  # (1, 128) f32
    b3s = pad2(b3[:, LATENT:], 1, LAT_PAD)
    w4p = pad2(w4, LAT_PAD, H2).astype(bf16)                # (128, 64)
    w6p = pad2(w6, H1, IN_PAD).astype(bf16)                 # (256, 896)
    b6p = pad2(b6, 1, IN_PAD)                               # (1, 896) f32
    return (w1p, b1, w2.astype(bf16), b2, w3m, b3m, w3s, b3s,
            w4p, b4, w5.astype(bf16), b5, w6p, b6p)


def vae_forward(x_nchw, eps, prepared_params):
    B = x_nchw.shape[0]
    tile_b = min(TILE_B_MAX, _round_up(B, 8))
    b_pad = _round_up(B, tile_b)
    num_tiles = b_pad // tile_b

    # Lane-dense, batch-padded input slabs (bf16 input halves the x DMA).
    x_flat = x_nchw.reshape(B, IN_FEATURES).astype(jnp.float32)
    x_pad = jnp.pad(x_flat, ((0, b_pad - B), (0, IN_PAD - IN_FEATURES)))
    x_pad = x_pad.astype(jnp.bfloat16)
    eps_pad = jnp.pad(eps.astype(jnp.float32),
                      ((0, b_pad - B), (0, LAT_PAD - LATENT)))

    # Activation tiles march over the batch grid; weights stay VMEM-resident.
    def tile_spec(cols):
        return pl.BlockSpec((tile_b, cols), lambda i: (i, 0))

    def resident(arr):
        return pl.BlockSpec(arr.shape, lambda i: (0, 0))

    in_specs = [tile_spec(IN_PAD), tile_spec(LAT_PAD)]
    in_specs += [resident(p) for p in prepared_params]

    out_specs = (
        pl.BlockSpec((tile_b, IN_PAD), lambda i: (i, 0)),
        pl.BlockSpec((1, 1, LAT_PAD), lambda i: (i, 0, 0)),
    )
    out_shape = (
        jax.ShapeDtypeStruct((b_pad, IN_PAD), jnp.float32),
        jax.ShapeDtypeStruct((num_tiles, 1, LAT_PAD), jnp.float32),
    )

    # Advisory cost estimate so XLA schedules surrounding ops sensibly.
    param_bytes = int(sum(p.size * p.dtype.itemsize for p in prepared_params))
    flops = 2 * b_pad * (IN_PAD * H1 + H1 * H2 + 2 * H2 * LAT_PAD
                         + LAT_PAD * H2 + H2 * H1 + H1 * IN_PAD)
    cost = pl.CostEstimate(
        flops=flops,
        transcendentals=b_pad * (IN_PAD + LAT_PAD),
        bytes_accessed=(param_bytes
                        + b_pad * (IN_PAD * 2 + LAT_PAD * 4 + IN_PAD * 4)
                        + num_tiles * LAT_PAD * 4),
    )

    kernel = functools.partial(_vae_kernel, tile_b=tile_b, batch_size=B)
    out_pad, kld_parts = pl.pallas_call(
        kernel,
        grid=(num_tiles,),
        in_specs=in_specs,
        out_specs=out_specs,
        out_shape=out_shape,
        compiler_params=pltpu.CompilerParams(
            dimension_semantics=("parallel",)),
        cost_estimate=cost,
    )(x_pad, eps_pad, *prepared_params)

    h_hat = out_pad[:B, :IN_FEATURES].reshape(B, 1, 28, 28)
    kld = 0.5 * jnp.sum(kld_parts) / (B * 28 * 28)
    return h_hat, kld


if __name__ == "__main__":
    root = jax.random.PRNGKey(0)
    k_x, k_eps, k_p = jax.random.split(root, 3)

    params = init_vae_params(k_p)
    prepared = prepare_params(params)

    # Input consistent with the module: MNIST-like NCHW batch.
    B = 2
    x = jax.random.uniform(k_x, (B, 1, 28, 28), jnp.float32)
    # randn_like(sigma): standard-normal noise for the reparameterization.
    eps = jax.random.normal(k_eps, (B, LATENT), jnp.float32)

    h_hat, kld = vae_forward(x, eps, prepared)
    jax.block_until_ready((h_hat, kld))

    assert h_hat.shape == (B, 1, 28, 28)
    assert h_hat.dtype == jnp.float32
    assert kld.shape == ()
    assert bool(jnp.isfinite(kld))
    assert bool(jnp.all(jnp.isfinite(h_hat)))
    print("KERNEL_OK")
</pallas_src>

<mosaic_0001>
module attributes {stable_mosaic.version = 11 : i64} {
  func.func @_vae_kernel(%arg0: i32, %arg1: memref<8x896xbf16, #tpu.memory_space<vmem>>, %arg2: memref<8x128xf32, #tpu.memory_space<vmem>>, %arg3: memref<896x256xbf16, #tpu.memory_space<vmem>>, %arg4: memref<1x256xf32, #tpu.memory_space<vmem>>, %arg5: memref<256x64xbf16, #tpu.memory_space<vmem>>, %arg6: memref<1x64xf32, #tpu.memory_space<vmem>>, %arg7: memref<64x128xbf16, #tpu.memory_space<vmem>>, %arg8: memref<1x128xf32, #tpu.memory_space<vmem>>, %arg9: memref<64x128xbf16, #tpu.memory_space<vmem>>, %arg10: memref<1x128xf32, #tpu.memory_space<vmem>>, %arg11: memref<128x64xbf16, #tpu.memory_space<vmem>>, %arg12: memref<1x64xf32, #tpu.memory_space<vmem>>, %arg13: memref<64x256xbf16, #tpu.memory_space<vmem>>, %arg14: memref<1x256xf32, #tpu.memory_space<vmem>>, %arg15: memref<256x896xbf16, #tpu.memory_space<vmem>>, %arg16: memref<1x896xf32, #tpu.memory_space<vmem>>, %arg17: memref<8x896xf32, #tpu.memory_space<vmem>>, %arg18: memref<1x1x128xf32, #tpu.memory_space<vmem>>) attributes {dimension_semantics = [#tpu.dimension_semantics<parallel>], iteration_bounds = array<i64: 1>, scalar_prefetch = 0 : i64, scratch_operands = 0 : i64, tpu.core_type = #tpu.core_type<tc>, window_params = [{transform_indices = @transform_0, window_bounds = array<i64: 8, 896>}, {transform_indices = @transform_1, window_bounds = array<i64: 8, 128>}, {pipeline_mode = #tpu.pipeline_mode<synchronous>, transform_indices = @transform_2, window_bounds = array<i64: 896, 256>}, {pipeline_mode = #tpu.pipeline_mode<synchronous>, transform_indices = @transform_3, window_bounds = array<i64: 1, 256>}, {pipeline_mode = #tpu.pipeline_mode<synchronous>, transform_indices = @transform_4, window_bounds = array<i64: 256, 64>}, {pipeline_mode = #tpu.pipeline_mode<synchronous>, transform_indices = @transform_5, window_bounds = array<i64: 1, 64>}, {pipeline_mode = #tpu.pipeline_mode<synchronous>, transform_indices = @transform_6, window_bounds = array<i64: 64, 128>}, {pipeline_mode = #tpu.pipeline_mode<synchronous>, transform_indices = @transform_7, window_bounds = array<i64: 1, 128>}, {pipeline_mode = #tpu.pipeline_mode<synchronous>, transform_indices = @transform_8, window_bounds = array<i64: 64, 128>}, {pipeline_mode = #tpu.pipeline_mode<synchronous>, transform_indices = @transform_9, window_bounds = array<i64: 1, 128>}, {pipeline_mode = #tpu.pipeline_mode<synchronous>, transform_indices = @transform_10, window_bounds = array<i64: 128, 64>}, {pipeline_mode = #tpu.pipeline_mode<synchronous>, transform_indices = @transform_11, window_bounds = array<i64: 1, 64>}, {pipeline_mode = #tpu.pipeline_mode<synchronous>, transform_indices = @transform_12, window_bounds = array<i64: 64, 256>}, {pipeline_mode = #tpu.pipeline_mode<synchronous>, transform_indices = @transform_13, window_bounds = array<i64: 1, 256>}, {pipeline_mode = #tpu.pipeline_mode<synchronous>, transform_indices = @transform_14, window_bounds = array<i64: 256, 896>}, {pipeline_mode = #tpu.pipeline_mode<synchronous>, transform_indices = @transform_15, window_bounds = array<i64: 1, 896>}, {transform_indices = @transform_16, window_bounds = array<i64: 8, 896>}, {transform_indices = @transform_17, window_bounds = array<i64: 1, 1, 128>}]} {
    %c0 = arith.constant 0 : index
    %c0_0 = arith.constant 0 : index
    %0 = vector.load %arg1[%c0, %c0_0] : memref<8x896xbf16, #tpu.memory_space<vmem>>, vector<8x896xbf16>
    %c0_1 = arith.constant 0 : index
    %c0_2 = arith.constant 0 : index
    %1 = vector.load %arg3[%c0_1, %c0_2] : memref<896x256xbf16, #tpu.memory_space<vmem>>, vector<896x256xbf16>
    %cst = arith.constant dense<0.000000e+00> : vector<8x256xf32>
    %2 = tpu.matmul %0, %1, %cst {dimension_numbers = #tpu.dot_dimension_numbers<[1], [0], [0], [1], [0, 0, 1, 1], [], []>} : vector<8x896xbf16>, vector<896x256xbf16>, vector<8x256xf32> -> vector<8x256xf32>
    %c0_3 = arith.constant 0 : index
    %c0_4 = arith.constant 0 : index
    %3 = vector.load %arg4[%c0_3, %c0_4] : memref<1x256xf32, #tpu.memory_space<vmem>>, vector<1x256xf32>
    %4 = vector.broadcast %3 : vector<1x256xf32> to vector<8x256xf32>
    %5 = arith.addf %2, %4 : vector<8x256xf32>
    %cst_5 = arith.constant 0.000000e+00 : f32
    %6 = vector.broadcast %cst_5 : f32 to vector<8x256xf32>
    %7 = arith.maximumf %5, %6 : vector<8x256xf32>
    %8 = arith.truncf %7 : vector<8x256xf32> to vector<8x256xbf16>
    %c0_6 = arith.constant 0 : index
    %c0_7 = arith.constant 0 : index
    %9 = vector.load %arg5[%c0_6, %c0_7] : memref<256x64xbf16, #tpu.memory_space<vmem>>, vector<256x64xbf16>
    %cst_8 = arith.constant dense<0.000000e+00> : vector<8x64xf32>
    %10 = tpu.matmul %8, %9, %cst_8 {dimension_numbers = #tpu.dot_dimension_numbers<[1], [0], [0], [1], [0, 0, 1, 1], [], []>} : vector<8x256xbf16>, vector<256x64xbf16>, vector<8x64xf32> -> vector<8x64xf32>
    %c0_9 = arith.constant 0 : index
    %c0_10 = arith.constant 0 : index
    %11 = vector.load %arg6[%c0_9, %c0_10] : memref<1x64xf32, #tpu.memory_space<vmem>>, vector<1x64xf32>
    %12 = vector.broadcast %11 : vector<1x64xf32> to vector<8x64xf32>
    %13 = arith.addf %10, %12 : vector<8x64xf32>
    %cst_11 = arith.constant 0.000000e+00 : f32
    %14 = vector.broadcast %cst_11 : f32 to vector<8x64xf32>
    %15 = arith.maximumf %13, %14 : vector<8x64xf32>
    %16 = arith.truncf %15 : vector<8x64xf32> to vector<8x64xbf16>
    %c0_12 = arith.constant 0 : index
    %c0_13 = arith.constant 0 : index
    %17 = vector.load %arg7[%c0_12, %c0_13] : memref<64x128xbf16, #tpu.memory_space<vmem>>, vector<64x128xbf16>
    %cst_14 = arith.constant dense<0.000000e+00> : vector<8x128xf32>
    %18 = tpu.matmul %16, %17, %cst_14 {dimension_numbers = #tpu.dot_dimension_numbers<[1], [0], [0], [1], [0, 0, 1, 1], [], []>} : vector<8x64xbf16>, vector<64x128xbf16>, vector<8x128xf32> -> vector<8x128xf32>
    %c0_15 = arith.constant 0 : index
    %c0_16 = arith.constant 0 : index
    %19 = vector.load %arg8[%c0_15, %c0_16] : memref<1x128xf32, #tpu.memory_space<vmem>>, vector<1x128xf32>
    %20 = vector.broadcast %19 : vector<1x128xf32> to vector<8x128xf32>
    %21 = arith.addf %18, %20 : vector<8x128xf32>
    %cst_17 = arith.constant 0.000000e+00 : f32
    %22 = vector.broadcast %cst_17 : f32 to vector<8x128xf32>
    %23 = arith.maximumf %21, %22 : vector<8x128xf32>
    %c0_18 = arith.constant 0 : index
    %c0_19 = arith.constant 0 : index
    %24 = vector.load %arg9[%c0_18, %c0_19] : memref<64x128xbf16, #tpu.memory_space<vmem>>, vector<64x128xbf16>
    %cst_20 = arith.constant dense<0.000000e+00> : vector<8x128xf32>
    %25 = tpu.matmul %16, %24, %cst_20 {dimension_numbers = #tpu.dot_dimension_numbers<[1], [0], [0], [1], [0, 0, 1, 1], [], []>} : vector<8x64xbf16>, vector<64x128xbf16>, vector<8x128xf32> -> vector<8x128xf32>
    %c0_21 = arith.constant 0 : index
    %c0_22 = arith.constant 0 : index
    %26 = vector.load %arg10[%c0_21, %c0_22] : memref<1x128xf32, #tpu.memory_space<vmem>>, vector<1x128xf32>
    %27 = vector.broadcast %26 : vector<1x128xf32> to vector<8x128xf32>
    %28 = arith.addf %25, %27 : vector<8x128xf32>
    %cst_23 = arith.constant 0.000000e+00 : f32
    %29 = vector.broadcast %cst_23 : f32 to vector<8x128xf32>
    %30 = arith.maximumf %28, %29 : vector<8x128xf32>
    %c0_24 = arith.constant 0 : index
    %c0_25 = arith.constant 0 : index
    %31 = vector.load %arg2[%c0_24, %c0_25] : memref<8x128xf32, #tpu.memory_space<vmem>>, vector<8x128xf32>
    %32 = arith.mulf %30, %31 : vector<8x128xf32>
    %33 = arith.addf %23, %32 : vector<8x128xf32>
    %34 = arith.truncf %33 : vector<8x128xf32> to vector<8x128xbf16>
    %c0_26 = arith.constant 0 : index
    %c0_27 = arith.constant 0 : index
    %35 = vector.load %arg11[%c0_26, %c0_27] : memref<128x64xbf16, #tpu.memory_space<vmem>>, vector<128x64xbf16>
    %cst_28 = arith.constant dense<0.000000e+00> : vector<8x64xf32>
    %36 = tpu.matmul %34, %35, %cst_28 {dimension_numbers = #tpu.dot_dimension_numbers<[1], [0], [0], [1], [0, 0, 1, 1], [], []>} : vector<8x128xbf16>, vector<128x64xbf16>, vector<8x64xf32> -> vector<8x64xf32>
    %c0_29 = arith.constant 0 : index
    %c0_30 = arith.constant 0 : index
    %37 = vector.load %arg12[%c0_29, %c0_30] : memref<1x64xf32, #tpu.memory_space<vmem>>, vector<1x64xf32>
    %38 = vector.broadcast %37 : vector<1x64xf32> to vector<8x64xf32>
    %39 = arith.addf %36, %38 : vector<8x64xf32>
    %cst_31 = arith.constant 0.000000e+00 : f32
    %40 = vector.broadcast %cst_31 : f32 to vector<8x64xf32>
    %41 = arith.maximumf %39, %40 : vector<8x64xf32>
    %42 = arith.truncf %41 : vector<8x64xf32> to vector<8x64xbf16>
    %c0_32 = arith.constant 0 : index
    %c0_33 = arith.constant 0 : index
    %43 = vector.load %arg13[%c0_32, %c0_33] : memref<64x256xbf16, #tpu.memory_space<vmem>>, vector<64x256xbf16>
    %cst_34 = arith.constant dense<0.000000e+00> : vector<8x256xf32>
    %44 = tpu.matmul %42, %43, %cst_34 {dimension_numbers = #tpu.dot_dimension_numbers<[1], [0], [0], [1], [0, 0, 1, 1], [], []>} : vector<8x64xbf16>, vector<64x256xbf16>, vector<8x256xf32> -> vector<8x256xf32>
    %c0_35 = arith.constant 0 : index
    %c0_36 = arith.constant 0 : index
    %45 = vector.load %arg14[%c0_35, %c0_36] : memref<1x256xf32, #tpu.memory_space<vmem>>, vector<1x256xf32>
    %46 = vector.broadcast %45 : vector<1x256xf32> to vector<8x256xf32>
    %47 = arith.addf %44, %46 : vector<8x256xf32>
    %cst_37 = arith.constant 0.000000e+00 : f32
    %48 = vector.broadcast %cst_37 : f32 to vector<8x256xf32>
    %49 = arith.maximumf %47, %48 : vector<8x256xf32>
    %50 = arith.truncf %49 : vector<8x256xf32> to vector<8x256xbf16>
    %c0_38 = arith.constant 0 : index
    %c0_39 = arith.constant 0 : index
    %51 = vector.load %arg15[%c0_38, %c0_39] : memref<256x896xbf16, #tpu.memory_space<vmem>>, vector<256x896xbf16>
    %cst_40 = arith.constant dense<0.000000e+00> : vector<8x896xf32>
    %52 = tpu.matmul %50, %51, %cst_40 {dimension_numbers = #tpu.dot_dimension_numbers<[1], [0], [0], [1], [0, 0, 1, 1], [], []>} : vector<8x256xbf16>, vector<256x896xbf16>, vector<8x896xf32> -> vector<8x896xf32>
    %c0_41 = arith.constant 0 : index
    %c0_42 = arith.constant 0 : index
    %53 = vector.load %arg16[%c0_41, %c0_42] : memref<1x896xf32, #tpu.memory_space<vmem>>, vector<1x896xf32>
    %54 = vector.broadcast %53 : vector<1x896xf32> to vector<8x896xf32>
    %55 = arith.addf %52, %54 : vector<8x896xf32>
    %56 = arith.negf %55 : vector<8x896xf32>
    %57 = math.exp %56 : vector<8x896xf32>
    %cst_43 = arith.constant 1.000000e+00 : f32
    %58 = vector.broadcast %cst_43 : f32 to vector<8x896xf32>
    %59 = arith.addf %58, %57 : vector<8x896xf32>
    %60 = arith.divf %58, %59 : vector<8x896xf32>
    %c0_44 = arith.constant 0 : index
    %c0_45 = arith.constant 0 : index
    %61 = vector.load %arg17[%c0_44, %c0_45] : memref<8x896xf32, #tpu.memory_space<vmem>>, vector<8x896xf32>
    tpu.vector_store %arg17[%c0_44, %c0_45], %60 {strides = array<i32>} : memref<8x896xf32, #tpu.memory_space<vmem>>, vector<8x896xf32>,
    %62 = tpu.iota {dimensions = array<i32: 0>} : vector<8x128xi32>
    %63 = tpu.iota {dimensions = array<i32: 1>} : vector<8x128xi32>
    %c8_i32 = arith.constant 8 : i32
    %64 = arith.muli %arg0, %c8_i32 : i32
    %65 = vector.broadcast %64 : i32 to vector<8x128xi32>
    %66 = arith.addi %62, %65 : vector<8x128xi32>
    %c2_i32 = arith.constant 2 : i32
    %67 = vector.broadcast %c2_i32 : i32 to vector<8x128xi32>
    %68 = arith.cmpi slt, %66, %67 : vector<8x128xi32>
    %c10_i32 = arith.constant 10 : i32
    %69 = vector.broadcast %c10_i32 : i32 to vector<8x128xi32>
    %70 = arith.cmpi slt, %63, %69 : vector<8x128xi32>
    %71 = arith.andi %68, %70 : vector<8x128xi1>
    %72 = arith.mulf %30, %30 : vector<8x128xf32>
    %73 = arith.mulf %23, %23 : vector<8x128xf32>
    %74 = arith.addf %73, %72 : vector<8x128xf32>
    %cst_46 = arith.constant 9.99999993E-9 : f32
    %75 = vector.broadcast %cst_46 : f32 to vector<8x128xf32>
    %76 = arith.addf %75, %72 : vector<8x128xf32>
    %77 = math.log %76 : vector<8x128xf32>
    %78 = arith.subf %74, %77 : vector<8x128xf32>
    %cst_47 = arith.constant 1.000000e+00 : f32
    %79 = vector.broadcast %cst_47 : f32 to vector<8x128xf32>
    %80 = arith.subf %78, %79 : vector<8x128xf32>
    %cst_48 = arith.constant 0.000000e+00 : f32
    %81 = vector.broadcast %cst_48 : f32 to vector<8x128xf32>
    %82 = arith.select %71, %80, %81 : vector<8x128xi1>, vector<8x128xf32>
    %cst_49 = arith.constant dense<0.000000e+00> : vector<128xf32>
    %83 = vector.multi_reduction <add>, %82, %cst_49 [0] : vector<8x128xf32> to vector<128xf32>
    %84 = vector.shape_cast %83 : vector<128xf32> to vector<1x128xf32>
    %c0_50 = arith.constant 0 : index
    %c0_51 = arith.constant 0 : index
    %c0_52 = arith.constant 0 : index
    %85 = vector.load %arg18[%c0_50, %c0_51, %c0_52] : memref<1x1x128xf32, #tpu.memory_space<vmem>>, vector<1x1x128xf32>
    %86 = vector.shape_cast %85 : vector<1x1x128xf32> to vector<1x128xf32>
    %87 = vector.shape_cast %84 : vector<1x128xf32> to vector<1x1x128xf32>
    tpu.vector_store %arg18[%c0_50, %c0_51, %c0_52], %87 {strides = array<i32>} : memref<1x1x128xf32, #tpu.memory_space<vmem>>, vector<1x1x128xf32>,
    return
  }
  func.func @transform_0(%arg0: i32) -> (i32, i32) {
    %c0_i32 = arith.constant 0 : i32
    %c0_i32_0 = arith.constant 0 : i32
    return %arg0, %c0_i32 : i32, i32
  }
  func.func @transform_1(%arg0: i32) -> (i32, i32) {
    %c0_i32 = arith.constant 0 : i32
    %c0_i32_0 = arith.constant 0 : i32
    return %arg0, %c0_i32 : i32, i32
  }
  func.func @transform_2(%arg0: i32) -> (i32, i32) {
    %c0_i32 = arith.constant 0 : i32
    %c0_i32_0 = arith.constant 0 : i32
    %c0_i32_1 = arith.constant 0 : i32
    return %c0_i32, %c0_i32_0 : i32, i32
  }
  func.func @transform_3(%arg0: i32) -> (i32, i32) {
    %c0_i32 = arith.constant 0 : i32
    %c0_i32_0 = arith.constant 0 : i32
    %c0_i32_1 = arith.constant 0 : i32
    return %c0_i32, %c0_i32_0 : i32, i32
  }
  func.func @transform_4(%arg0: i32) -> (i32, i32) {
    %c0_i32 = arith.constant 0 : i32
    %c0_i32_0 = arith.constant 0 : i32
    %c0_i32_1 = arith.constant 0 : i32
    return %c0_i32, %c0_i32_0 : i32, i32
  }
  func.func @transform_5(%arg0: i32) -> (i32, i32) {
    %c0_i32 = arith.constant 0 : i32
    %c0_i32_0 = arith.constant 0 : i32
    %c0_i32_1 = arith.constant 0 : i32
    return %c0_i32, %c0_i32_0 : i32, i32
  }
  func.func @transform_6(%arg0: i32) -> (i32, i32) {
    %c0_i32 = arith.constant 0 : i32
    %c0_i32_0 = arith.constant 0 : i32
    %c0_i32_1 = arith.constant 0 : i32
    return %c0_i32, %c0_i32_0 : i32, i32
  }
  func.func @transform_7(%arg0: i32) -> (i32, i32) {
    %c0_i32 = arith.constant 0 : i32
    %c0_i32_0 = arith.constant 0 : i32
    %c0_i32_1 = arith.constant 0 : i32
    return %c0_i32, %c0_i32_0 : i32, i32
  }
  func.func @transform_8(%arg0: i32) -> (i32, i32) {
    %c0_i32 = arith.constant 0 : i32
    %c0_i32_0 = arith.constant 0 : i32
    %c0_i32_1 = arith.constant 0 : i32
    return %c0_i32, %c0_i32_0 : i32, i32
  }
  func.func @transform_9(%arg0: i32) -> (i32, i32) {
    %c0_i32 = arith.constant 0 : i32
    %c0_i32_0 = arith.constant 0 : i32
    %c0_i32_1 = arith.constant 0 : i32
    return %c0_i32, %c0_i32_0 : i32, i32
  }
  func.func @transform_10(%arg0: i32) -> (i32, i32) {
    %c0_i32 = arith.constant 0 : i32
    %c0_i32_0 = arith.constant 0 : i32
    %c0_i32_1 = arith.constant 0 : i32
    return %c0_i32, %c0_i32_0 : i32, i32
  }
  func.func @transform_11(%arg0: i32) -> (i32, i32) {
    %c0_i32 = arith.constant 0 : i32
    %c0_i32_0 = arith.constant 0 : i32
    %c0_i32_1 = arith.constant 0 : i32
    return %c0_i32, %c0_i32_0 : i32, i32
  }
  func.func @transform_12(%arg0: i32) -> (i32, i32) {
    %c0_i32 = arith.constant 0 : i32
    %c0_i32_0 = arith.constant 0 : i32
    %c0_i32_1 = arith.constant 0 : i32
    return %c0_i32, %c0_i32_0 : i32, i32
  }
  func.func @transform_13(%arg0: i32) -> (i32, i32) {
    %c0_i32 = arith.constant 0 : i32
    %c0_i32_0 = arith.constant 0 : i32
    %c0_i32_1 = arith.constant 0 : i32
    return %c0_i32, %c0_i32_0 : i32, i32
  }
  func.func @transform_14(%arg0: i32) -> (i32, i32) {
    %c0_i32 = arith.constant 0 : i32
    %c0_i32_0 = arith.constant 0 : i32
    %c0_i32_1 = arith.constant 0 : i32
    return %c0_i32, %c0_i32_0 : i32, i32
  }
  func.func @transform_15(%arg0: i32) -> (i32, i32) {
    %c0_i32 = arith.constant 0 : i32
    %c0_i32_0 = arith.constant 0 : i32
    %c0_i32_1 = arith.constant 0 : i32
    return %c0_i32, %c0_i32_0 : i32, i32
  }
  func.func @transform_16(%arg0: i32) -> (i32, i32) {
    %c0_i32 = arith.constant 0 : i32
    %c0_i32_0 = arith.constant 0 : i32
    return %arg0, %c0_i32 : i32, i32
  }
  func.func @transform_17(%arg0: i32) -> (i32, i32, i32) {
    %c0_i32 = arith.constant 0 : i32
    %c0_i32_0 = arith.constant 0 : i32
    %c0_i32_1 = arith.constant 0 : i32
    return %arg0, %c0_i32, %c0_i32_0 : i32, i32, i32
  }
}

</mosaic_0001>

<llo_original>
// kernel: tpu_custom_call.1
$region0: #{tpu_custom_call.1}
  #allocation0 [shape = 'u32[]', space=smem, size = 0x4, offset = 0x4, fixed_abs, tag = 'smem constant byte address 0x4 - core index']
  #allocation1 [shape = 'u32[144,128]{1,0:T(1,128)}', space=vmem, size = 0x12000, scoped, tag = 'internal scratch']
  %s0 = inlined_call_operand.vmem [shape: bf16[8,896], index: 0, kind: input, shape index: {}]
  %s1 = inlined_call_operand.vmem [shape: f32[8,128], index: 1, kind: input, shape index: {}]
  %s2 = inlined_call_operand.hbm [shape: bf16[896,256], index: 2, kind: input, shape index: {}]
  %s3 = inlined_call_operand.vmem [shape: f32[1,256], index: 3, kind: input, shape index: {}]
  %s4 = inlined_call_operand.vmem [shape: bf16[256,64], index: 4, kind: input, shape index: {}]
  %s5 = inlined_call_operand.vmem [shape: f32[1,64], index: 5, kind: input, shape index: {}]
  %s6 = inlined_call_operand.vmem [shape: bf16[64,128], index: 6, kind: input, shape index: {}]
  %s7 = inlined_call_operand.vmem [shape: f32[1,128], index: 7, kind: input, shape index: {}]
  %s8 = inlined_call_operand.vmem [shape: bf16[64,128], index: 8, kind: input, shape index: {}]
  %s9 = inlined_call_operand.vmem [shape: f32[1,128], index: 9, kind: input, shape index: {}]
  %s10 = inlined_call_operand.vmem [shape: bf16[128,64], index: 10, kind: input, shape index: {}]
  %s11 = inlined_call_operand.vmem [shape: f32[1,64], index: 11, kind: input, shape index: {}]
  %s12 = inlined_call_operand.vmem [shape: bf16[64,256], index: 12, kind: input, shape index: {}]
  %s13 = inlined_call_operand.vmem [shape: f32[1,256], index: 13, kind: input, shape index: {}]
  %s14 = inlined_call_operand.hbm [shape: bf16[256,896], index: 14, kind: input, shape index: {}]
  %s15 = inlined_call_operand.vmem [shape: f32[1,896], index: 15, kind: input, shape index: {}]
  %s16 = inlined_call_operand.hbm [shape: f32[8,896], index: 16, kind: output, shape index: {0}]
  %s17 = inlined_call_operand.hbm [shape: f32[1,1,128], index: 17, kind: output, shape index: {1}]
  %18 = xla_tuple %s16, %s17
  %s19 = sld [smem:[#allocation0]]
  $region90: #{tpu_custom_call.1} parent=0
    _
  %s21 = ssub.s32 1, %s19
  %s22 = scalar_select 0, %s21, %s19
  $region1: #{tpu_custom_call.1} parent=0
    #allocation2 [shape = 'u8[458752]{0}', space=vmem, size = 0x70000, scoped, tag = 'input window, operand 2, single buffered']
    #allocation3 [shape = 's32[1]{0}', space=sflag, size = 0x4, scoped, tag = 'scoped memory for tpu_custom_call.1']
    #allocation4 [shape = 's32[1]{0}', space=sflag, size = 0x4, scoped, tag = 'scoped memory for tpu_custom_call.1']
    #allocation5 [shape = 'u8[458752]{0}', space=vmem, size = 0x70000, scoped, tag = 'input window, operand 14, single buffered']
    #allocation6 [shape = 's32[1]{0}', space=sflag, size = 0x4, scoped, tag = 'scoped memory for tpu_custom_call.1']
    #allocation7 [shape = 'u8[28672]{0}', space=vmem, size = 0x7000, scoped, tag = 'output window, operand 0, single buffered']
    #allocation8 [shape = 'u8[512]{0}', space=vmem, size = 0x400, scoped, tag = 'output window, operand 1, single buffered']
    #allocation9 [shape = 's32[1]{0}', space=sflag, size = 0x4, scoped, tag = 'scoped memory for tpu_custom_call.1']
    %23 = vsyncpa [#allocation3], 0
    %24 = vsyncpa [#allocation6], 0
    %25 = vsyncpa [#allocation4], 0
    %26 = vsyncpa [#allocation9], 0
    // Predicated region
    $region2: #{tpu_custom_call.1} parent=1 // pred_check
      _
    $region3: #{tpu_custom_call.1} parent=1 // pred_check_branch
      %28 = sbr.rel (0) target = $region5
    $region4: #{tpu_custom_call.1} parent=1 // pred_region
      _
    $region5: #{tpu_custom_call.1} parent=1 // pred_fallthru
      _
    // Predicated region
    $region6: #{tpu_custom_call.1} parent=1 // pred_check
      _
    $region7: #{tpu_custom_call.1} parent=1 // pred_check_branch
      %30 = sbr.rel (0) target = $region9
    $region8: #{tpu_custom_call.1} parent=1 // pred_region
      _
    $region9: #{tpu_custom_call.1} parent=1 // pred_fallthru
      _
    // Predicated region
    $region10: #{tpu_custom_call.1} parent=1 // pred_check
      _
    $region11: #{tpu_custom_call.1} parent=1 // pred_check_branch
      %32 = sbr.rel (0) target = $region13
    $region12: #{tpu_custom_call.1} parent=1 // pred_region
      %s34 = ssub.s32 14336, 14336
      %35 = vsyncadd [#allocation3], %s34
      %s36 = sshll.u32 [#allocation2], 4
      %s37 = int_to_ptr.vmem [resolvable:$true] %s36
      %42 = dma.hbm_to_vmem [thread:$0]  %s2, 14336, %s37, [#allocation3], 128, 128, 8
    $region13: #{tpu_custom_call.1} parent=1 // pred_fallthru
      _
    // Predicated region
    $region14: #{tpu_custom_call.1} parent=1 // pred_check
      _
    $region15: #{tpu_custom_call.1} parent=1 // pred_check_branch
      %44 = sbr.rel (0) target = $region17
    $region16: #{tpu_custom_call.1} parent=1 // pred_region
      _
    $region17: #{tpu_custom_call.1} parent=1 // pred_fallthru
      _
    // Predicated region
    $region18: #{tpu_custom_call.1} parent=1 // pred_check
      _
    $region19: #{tpu_custom_call.1} parent=1 // pred_check_branch
      %46 = sbr.rel (0) target = $region21
    $region20: #{tpu_custom_call.1} parent=1 // pred_region
      _
    $region21: #{tpu_custom_call.1} parent=1 // pred_fallthru
      _
    // Predicated region
    $region22: #{tpu_custom_call.1} parent=1 // pred_check
      _
    $region23: #{tpu_custom_call.1} parent=1 // pred_check_branch
      %48 = sbr.rel (0) target = $region25
    $region24: #{tpu_custom_call.1} parent=1 // pred_region
      _
    $region25: #{tpu_custom_call.1} parent=1 // pred_fallthru
      _
    // Predicated region
    $region26: #{tpu_custom_call.1} parent=1 // pred_check
      _
    $region27: #{tpu_custom_call.1} parent=1 // pred_check_branch
      %50 = sbr.rel (0) target = $region29
    $region28: #{tpu_custom_call.1} parent=1 // pred_region
      _
    $region29: #{tpu_custom_call.1} parent=1 // pred_fallthru
      _
    // Predicated region
    $region30: #{tpu_custom_call.1} parent=1 // pred_check
      _
    $region31: #{tpu_custom_call.1} parent=1 // pred_check_branch
      %52 = sbr.rel (0) target = $region33
    $region32: #{tpu_custom_call.1} parent=1 // pred_region
      _
    $region33: #{tpu_custom_call.1} parent=1 // pred_fallthru
      _
    // Predicated region
    $region34: #{tpu_custom_call.1} parent=1 // pred_check
      _
    $region35: #{tpu_custom_call.1} parent=1 // pred_check_branch
      %54 = sbr.rel (0) target = $region37
    $region36: #{tpu_custom_call.1} parent=1 // pred_region
      _
    $region37: #{tpu_custom_call.1} parent=1 // pred_fallthru
      _
    // Predicated region
    $region38: #{tpu_custom_call.1} parent=1 // pred_check
      _
    $region39: #{tpu_custom_call.1} parent=1 // pred_check_branch
      %56 = sbr.rel (0) target = $region41
    $region40: #{tpu_custom_call.1} parent=1 // pred_region
      _
    $region41: #{tpu_custom_call.1} parent=1 // pred_fallthru
      _
    // Predicated region
    $region42: #{tpu_custom_call.1} parent=1 // pred_check
      _
    $region43: #{tpu_custom_call.1} parent=1 // pred_check_branch
      %58 = sbr.rel (0) target = $region45
    $region44: #{tpu_custom_call.1} parent=1 // pred_region
      _
    $region45: #{tpu_custom_call.1} parent=1 // pred_fallthru
      _
    // Predicated region
    $region46: #{tpu_custom_call.1} parent=1 // pred_check
      _
    $region47: #{tpu_custom_call.1} parent=1 // pred_check_branch
      %60 = sbr.rel (0) target = $region49
    $region48: #{tpu_custom_call.1} parent=1 // pred_region
      _
    $region49: #{tpu_custom_call.1} parent=1 // pred_fallthru
      _
    // Predicated region
    $region50: #{tpu_custom_call.1} parent=1 // pred_check
      _
    $region51: #{tpu_custom_call.1} parent=1 // pred_check_branch
      %62 = sbr.rel (0) target = $region53
    $region52: #{tpu_custom_call.1} parent=1 // pred_region
      _
    $region53: #{tpu_custom_call.1} parent=1 // pred_fallthru
      _
    // Predicated region
    $region54: #{tpu_custom_call.1} parent=1 // pred_check
      _
    $region55: #{tpu_custom_call.1} parent=1 // pred_check_branch
      %64 = sbr.rel (0) target = $region57
    $region56: #{tpu_custom_call.1} parent=1 // pred_region
      _
    $region57: #{tpu_custom_call.1} parent=1 // pred_fallthru
      _
    // Predicated region
    $region58: #{tpu_custom_call.1} parent=1 // pred_check
      _
    $region59: #{tpu_custom_call.1} parent=1 // pred_check_branch
      %66 = sbr.rel (0) target = $region61
    $region60: #{tpu_custom_call.1} parent=1 // pred_region
      %s68 = ssub.s32 14336, 14336
      %69 = vsyncadd [#allocation6], %s68
      %s70 = sshll.u32 [#allocation5], 4
      %s71 = int_to_ptr.vmem [resolvable:$true] %s70
      %76 = dma.hbm_to_vmem [thread:$0]  %s14, 14336, %s71, [#allocation6], 448, 448, 28
    $region61: #{tpu_custom_call.1} parent=1 // pred_fallthru
      _
    // Predicated region
    $region62: #{tpu_custom_call.1} parent=1 // pred_check
      _
    $region63: #{tpu_custom_call.1} parent=1 // pred_check_branch
      %78 = sbr.rel (0) target = $region65
    $region64: #{tpu_custom_call.1} parent=1 // pred_region
      _
    $region65: #{tpu_custom_call.1} parent=1 // pred_fallthru
      _
    // Predicated region
    $region66: #{tpu_custom_call.1} parent=1 // pred_check
      _
    $region67: #{tpu_custom_call.1} parent=1 // pred_check_branch
      %80 = sbr.rel (0) target = $region69
    $region68: #{tpu_custom_call.1} parent=1 // pred_region
      %81 = dma.done [#allocation3], 14336
    $region69: #{tpu_custom_call.1} parent=1 // pred_fallthru
      _
    // Predicated region
    $region70: #{tpu_custom_call.1} parent=1 // pred_check
      _
    $region71: #{tpu_custom_call.1} parent=1 // pred_check_branch
      %83 = sbr.rel (0) target = $region73
    $region72: #{tpu_custom_call.1} parent=1 // pred_region
      %84 = dma.done [#allocation6], 14336
    $region73: #{tpu_custom_call.1} parent=1 // pred_fallthru
      _
    %v86 = vld [vmem:[%s0] sm:$0xff]
    %v87 = vld [vmem:[%s0 + $0x8] sm:$0xff]
    %v88 = vld [vmem:[%s0 + $0x10] sm:$0xff]
    %v89 = vld [vmem:[%s0 + $0x18] sm:$0xf]
    %v90 = vld [vmem:[#allocation2] sm:$0xff]
    %v91 = vld [vmem:[#allocation2 + $0x8] sm:$0xff]
    %v92 = vld [vmem:[#allocation2 + $0x10] sm:$0xff]
    %v93 = vld [vmem:[#allocation2 + $0x18] sm:$0xff]
    %v94 = vld [vmem:[#allocation2 + $0x20] sm:$0xff]
    %v95 = vld [vmem:[#allocation2 + $0x28] sm:$0xff]
    %v96 = vld [vmem:[#allocation2 + $0x30] sm:$0xff]
    %v97 = vld [vmem:[#allocation2 + $0x38] sm:$0xff]
    %v98 = vld [vmem:[#allocation2 + $0x40] sm:$0xff]
    %v99 = vld [vmem:[#allocation2 + $0x48] sm:$0xff]
    %v100 = vld [vmem:[#allocation2 + $0x50] sm:$0xff]
    %v101 = vld [vmem:[#allocation2 + $0x58] sm:$0xff]
    %v102 = vld [vmem:[#allocation2 + $0x60] sm:$0xff]
    %v103 = vld [vmem:[#allocation2 + $0x68] sm:$0xff]
    %v104 = vld [vmem:[#allocation2 + $0x70] sm:$0xff]
    %v105 = vld [vmem:[#allocation2 + $0x78] sm:$0xff]
    %v106 = vld [vmem:[#allocation2 + $0x80] sm:$0xff]
    %v107 = vld [vmem:[#allocation2 + $0x88] sm:$0xff]
    %v108 = vld [vmem:[#allocation2 + $0x90] sm:$0xff]
    %v109 = vld [vmem:[#allocation2 + $0x98] sm:$0xff]
    %v110 = vld [vmem:[#allocation2 + $0xa0] sm:$0xff]
    %v111 = vld [vmem:[#allocation2 + $0xa8] sm:$0xff]
    %v112 = vld [vmem:[#allocation2 + $0xb0] sm:$0xff]
    %v113 = vld [vmem:[#allocation2 + $0xb8] sm:$0xff]
    %v114 = vld [vmem:[#allocation2 + $0xc0] sm:$0xff]
    %v115 = vld [vmem:[#allocation2 + $0xc8] sm:$0xff]
    %v116 = vld [vmem:[#allocation2 + $0xd0] sm:$0xff]
    %v117 = vld [vmem:[#allocation2 + $0xd8] sm:$0xff]
    %v118 = vld [vmem:[#allocation2 + $0xe0] sm:$0xff]
    %v119 = vld [vmem:[#allocation2 + $0xe8] sm:$0xff]
    %v120 = vld [vmem:[#allocation2 + $0xf0] sm:$0xff]
    %v121 = vld [vmem:[#allocation2 + $0xf8] sm:$0xff]
    %v122 = vld [vmem:[#allocation2 + $0x100] sm:$0xff]
    %v123 = vld [vmem:[#allocation2 + $0x108] sm:$0xff]
    %v124 = vld [vmem:[#allocation2 + $0x110] sm:$0xff]
    %v125 = vld [vmem:[#allocation2 + $0x118] sm:$0xff]
    %v126 = vld [vmem:[#allocation2 + $0x120] sm:$0xff]
    %v127 = vld [vmem:[#allocation2 + $0x128] sm:$0xff]
    %v128 = vld [vmem:[#allocation2 + $0x130] sm:$0xff]
    %v129 = vld [vmem:[#allocation2 + $0x138] sm:$0xff]
    %v130 = vld [vmem:[#allocation2 + $0x140] sm:$0xff]
    %v131 = vld [vmem:[#allocation2 + $0x148] sm:$0xff]
    %v132 = vld [vmem:[#allocation2 + $0x150] sm:$0xff]
    %v133 = vld [vmem:[#allocation2 + $0x158] sm:$0xff]
    %v134 = vld [vmem:[#allocation2 + $0x160] sm:$0xff]
    %v135 = vld [vmem:[#allocation2 + $0x168] sm:$0xff]
    %v136 = vld [vmem:[#allocation2 + $0x170] sm:$0xff]
    %v137 = vld [vmem:[#allocation2 + $0x178] sm:$0xff]
    %v138 = vld [vmem:[#allocation2 + $0x180] sm:$0xff]
    %v139 = vld [vmem:[#allocation2 + $0x188] sm:$0xff]
    %v140 = vld [vmem:[#allocation2 + $0x190] sm:$0xff]
    %v141 = vld [vmem:[#allocation2 + $0x198] sm:$0xff]
    %v142 = vld [vmem:[#allocation2 + $0x1a0] sm:$0xff]
    %v143 = vld [vmem:[#allocation2 + $0x1a8] sm:$0xff]
    %v144 = vld [vmem:[#allocation2 + $0x1b0] sm:$0xff]
    %v145 = vld [vmem:[#allocation2 + $0x1b8] sm:$0xff]
    %v146 = vld [vmem:[#allocation2 + $0x1c0] sm:$0xff]
    %v147 = vld [vmem:[#allocation2 + $0x1c8] sm:$0xff]
    %v148 = vld [vmem:[#allocation2 + $0x1d0] sm:$0xff]
    %v149 = vld [vmem:[#allocation2 + $0x1d8] sm:$0xff]
    %v150 = vld [vmem:[#allocation2 + $0x1e0] sm:$0xff]
    %v151 = vld [vmem:[#allocation2 + $0x1e8] sm:$0xff]
    %v152 = vld [vmem:[#allocation2 + $0x1f0] sm:$0xff]
    %v153 = vld [vmem:[#allocation2 + $0x1f8] sm:$0xff]
    %v154 = vld [vmem:[#allocation2 + $0x200] sm:$0xff]
    %v155 = vld [vmem:[#allocation2 + $0x208] sm:$0xff]
    %v156 = vld [vmem:[#allocation2 + $0x210] sm:$0xff]
    %v157 = vld [vmem:[#allocation2 + $0x218] sm:$0xff]
    %v158 = vld [vmem:[#allocation2 + $0x220] sm:$0xff]
    %v159 = vld [vmem:[#allocation2 + $0x228] sm:$0xff]
    %v160 = vld [vmem:[#allocation2 + $0x230] sm:$0xff]
    %v161 = vld [vmem:[#allocation2 + $0x238] sm:$0xff]
    %v162 = vld [vmem:[#allocation2 + $0x240] sm:$0xff]
    %v163 = vld [vmem:[#allocation2 + $0x248] sm:$0xff]
    %v164 = vld [vmem:[#allocation2 + $0x250] sm:$0xff]
    %v165 = vld [vmem:[#allocation2 + $0x258] sm:$0xff]
    %v166 = vld [vmem:[#allocation2 + $0x260] sm:$0xff]
    %v167 = vld [vmem:[#allocation2 + $0x268] sm:$0xff]
    %v168 = vld [vmem:[#allocation2 + $0x270] sm:$0xff]
    %v169 = vld [vmem:[#allocation2 + $0x278] sm:$0xff]
    %v170 = vld [vmem:[#allocation2 + $0x280] sm:$0xff]
    %v171 = vld [vmem:[#allocation2 + $0x288] sm:$0xff]
    %v172 = vld [vmem:[#allocation2 + $0x290] sm:$0xff]
    %v173 = vld [vmem:[#allocation2 + $0x298] sm:$0xff]
    %v174 = vld [vmem:[#allocation2 + $0x2a0] sm:$0xff]
    %v175 = vld [vmem:[#allocation2 + $0x2a8] sm:$0xff]
    %v176 = vld [vmem:[#allocation2 + $0x2b0] sm:$0xff]
    %v177 = vld [vmem:[#allocation2 + $0x2b8] sm:$0xff]
    %v178 = vld [vmem:[#allocation2 + $0x2c0] sm:$0xff]
    %v179 = vld [vmem:[#allocation2 + $0x2c8] sm:$0xff]
    %v180 = vld [vmem:[#allocation2 + $0x2d0] sm:$0xff]
    %v181 = vld [vmem:[#allocation2 + $0x2d8] sm:$0xff]
    %v182 = vld [vmem:[#allocation2 + $0x2e0] sm:$0xff]
    %v183 = vld [vmem:[#allocation2 + $0x2e8] sm:$0xff]
    %v184 = vld [vmem:[#allocation2 + $0x2f0] sm:$0xff]
    %v185 = vld [vmem:[#allocation2 + $0x2f8] sm:$0xff]
    %v186 = vld [vmem:[#allocation2 + $0x300] sm:$0xff]
    %v187 = vld [vmem:[#allocation2 + $0x308] sm:$0xff]
    %v188 = vld [vmem:[#allocation2 + $0x310] sm:$0xff]
    %v189 = vld [vmem:[#allocation2 + $0x318] sm:$0xff]
    %v190 = vld [vmem:[#allocation2 + $0x320] sm:$0xff]
    %v191 = vld [vmem:[#allocation2 + $0x328] sm:$0xff]
    %v192 = vld [vmem:[#allocation2 + $0x330] sm:$0xff]
    %v193 = vld [vmem:[#allocation2 + $0x338] sm:$0xff]
    %v194 = vld [vmem:[#allocation2 + $0x340] sm:$0xff]
    %v195 = vld [vmem:[#allocation2 + $0x348] sm:$0xff]
    %v196 = vld [vmem:[#allocation2 + $0x350] sm:$0xff]
    %v197 = vld [vmem:[#allocation2 + $0x358] sm:$0xff]
    %v198 = vld [vmem:[#allocation2 + $0x360] sm:$0xff]
    %v199 = vld [vmem:[#allocation2 + $0x368] sm:$0xff]
    %v200 = vld [vmem:[#allocation2 + $0x370] sm:$0xff]
    %v201 = vld [vmem:[#allocation2 + $0x378] sm:$0xff]
    %v202 = vld [vmem:[%s3] sm:$0x3]
    %v204 = vlaneseq
    %v205 = vshrl.u32 %v204, 7
    %v206 = vsub.s32 0, %v205
    %v207 = vrot.slane %v202, %v206
    %v208 = vlaneseq
    %v209 = vshrl.u32 %v208, 7
    %v210 = vsub.s32 1, %v209
    %v211 = vrot.slane %v202, %v210
    %v218 = vunpack.c.l.b16 %v86
    %v219 = vunpack.c.h.b16 %v86
    %v220 = vunpack.c.l.b16 %v87
    %v221 = vunpack.c.h.b16 %v87
    %v222 = vunpack.c.l.b16 %v88
    %v223 = vunpack.c.h.b16 %v88
    %v224 = vunpack.c.l.b16 %v89
    %v225 = vpack.c.b16 %v218, %v218
    %v226 = vpack.c.b16 %v219, %v219
    %v227 = vpack.c.b16 %v220, %v220
    %v228 = vpack.c.b16 %v221, %v221
    %v229 = vpack.c.b16 %v222, %v222
    %v230 = vpack.c.b16 %v223, %v223
    %v231 = vpack.c.b16 %v224, %v224
    %v351 = vunpack.c.l.b16 %v90
    %v352 = vunpack.c.h.b16 %v90
    %v353 = vunpack.c.l.b16 %v91
    %v354 = vunpack.c.h.b16 %v91
    %v355 = vunpack.c.l.b16 %v92
    %v356 = vunpack.c.h.b16 %v92
    %v357 = vunpack.c.l.b16 %v93
    %v358 = vunpack.c.h.b16 %v93
    %v359 = vunpack.c.l.b16 %v94
    %v360 = vunpack.c.h.b16 %v94
    %v361 = vunpack.c.l.b16 %v95
    %v362 = vunpack.c.h.b16 %v95
    %v363 = vunpack.c.l.b16 %v96
    %v364 = vunpack.c.h.b16 %v96
    %v365 = vunpack.c.l.b16 %v97
    %v366 = vunpack.c.h.b16 %v97
    %v367 = vunpack.c.l.b16 %v98
    %v368 = vunpack.c.h.b16 %v98
    %v369 = vunpack.c.l.b16 %v99
    %v370 = vunpack.c.h.b16 %v99
    %v371 = vunpack.c.l.b16 %v100
    %v372 = vunpack.c.h.b16 %v100
    %v373 = vunpack.c.l.b16 %v101
    %v374 = vunpack.c.h.b16 %v101
    %v375 = vunpack.c.l.b16 %v102
    %v376 = vunpack.c.h.b16 %v102
    %v377 = vunpack.c.l.b16 %v103
    %v378 = vunpack.c.h.b16 %v103
    %v379 = vunpack.c.l.b16 %v104
    %v380 = vunpack.c.h.b16 %v104
    %v381 = vunpack.c.l.b16 %v105
    %v382 = vunpack.c.h.b16 %v105
    %v383 = vunpack.c.l.b16 %v106
    %v384 = vunpack.c.h.b16 %v106
    %v385 = vunpack.c.l.b16 %v107
    %v386 = vunpack.c.h.b16 %v107
    %v387 = vunpack.c.l.b16 %v108
    %v388 = vunpack.c.h.b16 %v108
    %v389 = vunpack.c.l.b16 %v109
    %v390 = vunpack.c.h.b16 %v109
    %v391 = vunpack.c.l.b16 %v110
    %v392 = vunpack.c.h.b16 %v110
    %v393 = vunpack.c.l.b16 %v111
    %v394 = vunpack.c.h.b16 %v111
    %v395 = vunpack.c.l.b16 %v112
    %v396 = vunpack.c.h.b16 %v112
    %v397 = vunpack.c.l.b16 %v113
    %v398 = vunpack.c.h.b16 %v113
    %v399 = vunpack.c.l.b16 %v114
    %v400 = vunpack.c.h.b16 %v114
    %v401 = vunpack.c.l.b16 %v115
    %v402 = vunpack.c.h.b16 %v115
    %v403 = vunpack.c.l.b16 %v116
    %v404 = vunpack.c.h.b16 %v116
    %v405 = vunpack.c.l.b16 %v117
    %v406 = vunpack.c.h.b16 %v117
    %v407 = vunpack.c.l.b16 %v118
    %v408 = vunpack.c.h.b16 %v118
    %v409 = vunpack.c.l.b16 %v119
    %v410 = vunpack.c.h.b16 %v119
    %v411 = vunpack.c.l.b16 %v120
    %v412 = vunpack.c.h.b16 %v120
    %v413 = vunpack.c.l.b16 %v121
    %v414 = vunpack.c.h.b16 %v121
    %v415 = vunpack.c.l.b16 %v122
    %v416 = vunpack.c.h.b16 %v122
    %v417 = vunpack.c.l.b16 %v123
    %v418 = vunpack.c.h.b16 %v123
    %v419 = vunpack.c.l.b16 %v124
    %v420 = vunpack.c.h.b16 %v124
    %v421 = vunpack.c.l.b16 %v125
    %v422 = vunpack.c.h.b16 %v125
    %v423 = vunpack.c.l.b16 %v126
    %v424 = vunpack.c.h.b16 %v126
    %v425 = vunpack.c.l.b16 %v127
    %v426 = vunpack.c.h.b16 %v127
    %v427 = vunpack.c.l.b16 %v128
    %v428 = vunpack.c.h.b16 %v128
    %v429 = vunpack.c.l.b16 %v129
    %v430 = vunpack.c.h.b16 %v129
    %v431 = vunpack.c.l.b16 %v130
    %v432 = vunpack.c.h.b16 %v130
    %v433 = vunpack.c.l.b16 %v131
    %v434 = vunpack.c.h.b16 %v131
    %v435 = vunpack.c.l.b16 %v132
    %v436 = vunpack.c.h.b16 %v132
    %v437 = vunpack.c.l.b16 %v133
    %v438 = vunpack.c.h.b16 %v133
    %v439 = vunpack.c.l.b16 %v134
    %v440 = vunpack.c.h.b16 %v134
    %v441 = vunpack.c.l.b16 %v135
    %v442 = vunpack.c.h.b16 %v135
    %v443 = vunpack.c.l.b16 %v136
    %v444 = vunpack.c.h.b16 %v136
    %v445 = vunpack.c.l.b16 %v137
    %v446 = vunpack.c.h.b16 %v137
    %v447 = vunpack.c.l.b16 %v138
    %v448 = vunpack.c.h.b16 %v138
    %v449 = vunpack.c.l.b16 %v139
    %v450 = vunpack.c.h.b16 %v139
    %v451 = vunpack.c.l.b16 %v140
    %v452 = vunpack.c.h.b16 %v140
    %v453 = vunpack.c.l.b16 %v141
    %v454 = vunpack.c.h.b16 %v141
    %v455 = vunpack.c.l.b16 %v142
    %v456 = vunpack.c.h.b16 %v142
    %v457 = vunpack.c.l.b16 %v143
    %v458 = vunpack.c.h.b16 %v143
    %v459 = vunpack.c.l.b16 %v144
    %v460 = vunpack.c.h.b16 %v144
    %v461 = vunpack.c.l.b16 %v145
    %v462 = vunpack.c.h.b16 %v145
    %v463 = vunpack.c.l.b16 %v146
    %v464 = vunpack.c.h.b16 %v146
    %v465 = vunpack.c.l.b16 %v147
    %v466 = vunpack.c.h.b16 %v147
    %v467 = vunpack.c.l.b16 %v148
    %v468 = vunpack.c.h.b16 %v148
    %v469 = vunpack.c.l.b16 %v149
    %v470 = vunpack.c.h.b16 %v149
    %v471 = vunpack.c.l.b16 %v150
    %v472 = vunpack.c.h.b16 %v150
    %v473 = vunpack.c.l.b16 %v151
    %v474 = vunpack.c.h.b16 %v151
    %v475 = vunpack.c.l.b16 %v152
    %v476 = vunpack.c.h.b16 %v152
    %v477 = vunpack.c.l.b16 %v153
    %v478 = vunpack.c.h.b16 %v153
    %v479 = vunpack.c.l.b16 %v154
    %v480 = vunpack.c.h.b16 %v154
    %v481 = vunpack.c.l.b16 %v155
    %v482 = vunpack.c.h.b16 %v155
    %v483 = vunpack.c.l.b16 %v156
    %v484 = vunpack.c.h.b16 %v156
    %v485 = vunpack.c.l.b16 %v157
    %v486 = vunpack.c.h.b16 %v157
    %v487 = vunpack.c.l.b16 %v158
    %v488 = vunpack.c.h.b16 %v158
    %v489 = vunpack.c.l.b16 %v159
    %v490 = vunpack.c.h.b16 %v159
    %v491 = vunpack.c.l.b16 %v160
    %v492 = vunpack.c.h.b16 %v160
    %v493 = vunpack.c.l.b16 %v161
    %v494 = vunpack.c.h.b16 %v161
    %v495 = vunpack.c.l.b16 %v162
    %v496 = vunpack.c.h.b16 %v162
    %v497 = vunpack.c.l.b16 %v163
    %v498 = vunpack.c.h.b16 %v163
    %v499 = vunpack.c.l.b16 %v164
    %v500 = vunpack.c.h.b16 %v164
    %v501 = vunpack.c.l.b16 %v165
    %v502 = vunpack.c.h.b16 %v165
    %v503 = vunpack.c.l.b16 %v166
    %v504 = vunpack.c.h.b16 %v166
    %v505 = vunpack.c.l.b16 %v167
    %v506 = vunpack.c.h.b16 %v167
    %v507 = vunpack.c.l.b16 %v168
    %v508 = vunpack.c.h.b16 %v168
    %v509 = vunpack.c.l.b16 %v169
    %v510 = vunpack.c.h.b16 %v169
    %v511 = vunpack.c.l.b16 %v170
    %v512 = vunpack.c.h.b16 %v170
    %v513 = vunpack.c.l.b16 %v171
    %v514 = vunpack.c.h.b16 %v171
    %v515 = vunpack.c.l.b16 %v172
    %v516 = vunpack.c.h.b16 %v172
    %v517 = vunpack.c.l.b16 %v173
    %v518 = vunpack.c.h.b16 %v173
    %v519 = vunpack.c.l.b16 %v174
    %v520 = vunpack.c.h.b16 %v174
    %v521 = vunpack.c.l.b16 %v175
    %v522 = vunpack.c.h.b16 %v175
    %v523 = vunpack.c.l.b16 %v176
    %v524 = vunpack.c.h.b16 %v176
    %v525 = vunpack.c.l.b16 %v177
    %v526 = vunpack.c.h.b16 %v177
    %v527 = vunpack.c.l.b16 %v178
    %v528 = vunpack.c.h.b16 %v178
    %v529 = vunpack.c.l.b16 %v179
    %v530 = vunpack.c.h.b16 %v179
    %v531 = vunpack.c.l.b16 %v180
    %v532 = vunpack.c.h.b16 %v180
    %v533 = vunpack.c.l.b16 %v181
    %v534 = vunpack.c.h.b16 %v181
    %v535 = vunpack.c.l.b16 %v182
    %v536 = vunpack.c.h.b16 %v182
    %v537 = vunpack.c.l.b16 %v183
    %v538 = vunpack.c.h.b16 %v183
    %v539 = vunpack.c.l.b16 %v184
    %v540 = vunpack.c.h.b16 %v184
    %v541 = vunpack.c.l.b16 %v185
    %v542 = vunpack.c.h.b16 %v185
    %v543 = vunpack.c.l.b16 %v186
    %v544 = vunpack.c.h.b16 %v186
    %v545 = vunpack.c.l.b16 %v187
    %v546 = vunpack.c.h.b16 %v187
    %v547 = vunpack.c.l.b16 %v188
    %v548 = vunpack.c.h.b16 %v188
    %v549 = vunpack.c.l.b16 %v189
    %v550 = vunpack.c.h.b16 %v189
    %v551 = vunpack.c.l.b16 %v190
    %v552 = vunpack.c.h.b16 %v190
    %v553 = vunpack.c.l.b16 %v191
    %v554 = vunpack.c.h.b16 %v191
    %v555 = vunpack.c.l.b16 %v192
    %v556 = vunpack.c.h.b16 %v192
    %v557 = vunpack.c.l.b16 %v193
    %v558 = vunpack.c.h.b16 %v193
    %v559 = vunpack.c.l.b16 %v194
    %v560 = vunpack.c.h.b16 %v194
    %v561 = vunpack.c.l.b16 %v195
    %v562 = vunpack.c.h.b16 %v195
    %v563 = vunpack.c.l.b16 %v196
    %v564 = vunpack.c.h.b16 %v196
    %v565 = vunpack.c.l.b16 %v197
    %v566 = vunpack.c.h.b16 %v197
    %v567 = vunpack.c.l.b16 %v198
    %v568 = vunpack.c.h.b16 %v198
    %v569 = vunpack.c.l.b16 %v199
    %v570 = vunpack.c.h.b16 %v199
    %v571 = vunpack.c.l.b16 %v200
    %v572 = vunpack.c.h.b16 %v200
    %v573 = vunpack.c.l.b16 %v201
    %v574 = vunpack.c.h.b16 %v201
    %v575 = vpack.c.b16 %v353, %v351
    %v576 = vpack.c.b16 %v354, %v352
    %v577 = vpack.c.b16 %v357, %v355
    %v578 = vpack.c.b16 %v358, %v356
    %v579 = vpack.c.b16 %v361, %v359
    %v580 = vpack.c.b16 %v362, %v360
    %v581 = vpack.c.b16 %v365, %v363
    %v582 = vpack.c.b16 %v366, %v364
    %v583 = vpack.c.b16 %v369, %v367
    %v584 = vpack.c.b16 %v370, %v368
    %v585 = vpack.c.b16 %v373, %v371
    %v586 = vpack.c.b16 %v374, %v372
    %v587 = vpack.c.b16 %v377, %v375
    %v588 = vpack.c.b16 %v378, %v376
    %v589 = vpack.c.b16 %v381, %v379
    %v590 = vpack.c.b16 %v382, %v380
    %v591 = vpack.c.b16 %v385, %v383
    %v592 = vpack.c.b16 %v386, %v384
    %v593 = vpack.c.b16 %v389, %v387
    %v594 = vpack.c.b16 %v390, %v388
    %v595 = vpack.c.b16 %v393, %v391
    %v596 = vpack.c.b16 %v394, %v392
    %v597 = vpack.c.b16 %v397, %v395
    %v598 = vpack.c.b16 %v398, %v396
    %v599 = vpack.c.b16 %v401, %v399
    %v600 = vpack.c.b16 %v402, %v400
    %v601 = vpack.c.b16 %v405, %v403
    %v602 = vpack.c.b16 %v406, %v404
    %v603 = vpack.c.b16 %v409, %v407
    %v604 = vpack.c.b16 %v410, %v408
    %v605 = vpack.c.b16 %v413, %v411
    %v606 = vpack.c.b16 %v414, %v412
    %v607 = vpack.c.b16 %v417, %v415
    %v608 = vpack.c.b16 %v418, %v416
    %v609 = vpack.c.b16 %v421, %v419
    %v610 = vpack.c.b16 %v422, %v420
    %v611 = vpack.c.b16 %v425, %v423
    %v612 = vpack.c.b16 %v426, %v424
    %v613 = vpack.c.b16 %v429, %v427
    %v614 = vpack.c.b16 %v430, %v428
    %v615 = vpack.c.b16 %v433, %v431
    %v616 = vpack.c.b16 %v434, %v432
    %v617 = vpack.c.b16 %v437, %v435
    %v618 = vpack.c.b16 %v438, %v436
    %v619 = vpack.c.b16 %v441, %v439
    %v620 = vpack.c.b16 %v442, %v440
    %v621 = vpack.c.b16 %v445, %v443
    %v622 = vpack.c.b16 %v446, %v444
    %v623 = vpack.c.b16 %v449, %v447
    %v624 = vpack.c.b16 %v450, %v448
    %v625 = vpack.c.b16 %v453, %v451
    %v626 = vpack.c.b16 %v454, %v452
    %v627 = vpack.c.b16 %v457, %v455
    %v628 = vpack.c.b16 %v458, %v456
    %v629 = vpack.c.b16 %v461, %v459
    %v630 = vpack.c.b16 %v462, %v460
    %v631 = vpack.c.b16 %v465, %v463
    %v632 = vpack.c.b16 %v466, %v464
    %v633 = vpack.c.b16 %v469, %v467
    %v634 = vpack.c.b16 %v470, %v468
    %v635 = vpack.c.b16 %v473, %v471
    %v636 = vpack.c.b16 %v474, %v472
    %v637 = vpack.c.b16 %v477, %v475
    %v638 = vpack.c.b16 %v478, %v476
    %v639 = vpack.c.b16 %v481, %v479
    %v640 = vpack.c.b16 %v482, %v480
    %v641 = vpack.c.b16 %v485, %v483
    %v642 = vpack.c.b16 %v486, %v484
    %v643 = vpack.c.b16 %v489, %v487
    %v644 = vpack.c.b16 %v490, %v488
    %v645 = vpack.c.b16 %v493, %v491
    %v646 = vpack.c.b16 %v494, %v492
    %v647 = vpack.c.b16 %v497, %v495
    %v648 = vpack.c.b16 %v498, %v496
    %v649 = vpack.c.b16 %v501, %v499
    %v650 = vpack.c.b16 %v502, %v500
    %v651 = vpack.c.b16 %v505, %v503
    %v652 = vpack.c.b16 %v506, %v504
    %v653 = vpack.c.b16 %v509, %v507
    %v654 = vpack.c.b16 %v510, %v508
    %v655 = vpack.c.b16 %v513, %v511
    %v656 = vpack.c.b16 %v514, %v512
    %v657 = vpack.c.b16 %v517, %v515
    %v658 = vpack.c.b16 %v518, %v516
    %v659 = vpack.c.b16 %v521, %v519
    %v660 = vpack.c.b16 %v522, %v520
    %v661 = vpack.c.b16 %v525, %v523
    %v662 = vpack.c.b16 %v526, %v524
    %v663 = vpack.c.b16 %v529, %v527
    %v664 = vpack.c.b16 %v530, %v528
    %v665 = vpack.c.b16 %v533, %v531
    %v666 = vpack.c.b16 %v534, %v532
    %v667 = vpack.c.b16 %v537, %v535
    %v668 = vpack.c.b16 %v538, %v536
    %v669 = vpack.c.b16 %v541, %v539
    %v670 = vpack.c.b16 %v542, %v540
    %v671 = vpack.c.b16 %v545, %v543
    %v672 = vpack.c.b16 %v546, %v544
    %v673 = vpack.c.b16 %v549, %v547
    %v674 = vpack.c.b16 %v550, %v548
    %v675 = vpack.c.b16 %v553, %v551
    %v676 = vpack.c.b16 %v554, %v552
    %v677 = vpack.c.b16 %v557, %v555
    %v678 = vpack.c.b16 %v558, %v556
    %v679 = vpack.c.b16 %v561, %v559
    %v680 = vpack.c.b16 %v562, %v560
    %v681 = vpack.c.b16 %v565, %v563
    %v682 = vpack.c.b16 %v566, %v564
    %v683 = vpack.c.b16 %v569, %v567
    %v684 = vpack.c.b16 %v570, %v568
    %v685 = vpack.c.b16 %v573, %v571
    %v686 = vpack.c.b16 %v574, %v572
    %799 = vmatprep.subr.bf16.mxu0 %v590
    %800 = vmatpush1.bf16.msra.mxu0 %v589
    %801 = vmatprep.subr.bf16.mxu0 %v588
    %802 = vmatpush1.bf16.msra.mxu0 %v587
    %803 = vmatprep.subr.bf16.mxu0 %v586
    %804 = vmatpush1.bf16.msra.mxu0 %v585
    %805 = vmatprep.subr.bf16.mxu0 %v584
    %806 = vmatpush1.bf16.msra.mxu0 %v583
    %807 = vmatprep.subr.bf16.mxu0 %v582
    %808 = vmatpush1.bf16.msra.mxu0 %v581
    %809 = vmatprep.subr.bf16.mxu0 %v580
    %810 = vmatpush1.bf16.msra.mxu0 %v579
    %811 = vmatprep.subr.bf16.mxu0 %v578
    %812 = vmatpush1.bf16.msra.mxu0 %v577
    %813 = vmatprep.subr.bf16.mxu0 %v576
    %814 = vmatpush1.bf16.msra.mxu0 %v575
    %815 = vmatprep.subr.bf16.mxu0 %v606
    %816 = vmatpush2.bf16.msra.mxu0 %v605
    %817 = vmatprep.subr.bf16.mxu0 %v604
    %818 = vmatpush2.bf16.msra.mxu0 %v603
    %819 = vmatprep.subr.bf16.mxu0 %v602
    %820 = vmatpush2.bf16.msra.mxu0 %v601
    %821 = vmatprep.subr.bf16.mxu0 %v600
    %822 = vmatpush2.bf16.msra.mxu0 %v599
    %823 = vmatprep.subr.bf16.mxu0 %v598
    %824 = vmatpush2.bf16.msra.mxu0 %v597
    %825 = vmatprep.subr.bf16.mxu0 %v596
    %826 = vmatpush2.bf16.msra.mxu0 %v595
    %827 = vmatprep.subr.bf16.mxu0 %v594
    %828 = vmatpush2.bf16.msra.mxu0 %v593
    %829 = vmatprep.subr.bf16.mxu0 %v592
    %830 = vmatpush2.bf16.msra.mxu0 %v591
    %831 = vmatprep.mubr.bf16.mxu0 %v226
    %832 = vmatmul.mubr.bf16.gmra.mxu0 %v225
    %v833 = vpop.f32.mrf.mxu0
    %v834 = vadd.f32 %v207, %v833
    %v835 = vpop.f32.mrf.mxu0
    %v836 = vadd.f32 %v211, %v835
    %v837 = vpop.f32.mrf.mxu0
    %v838 = vpop.f32.mrf.mxu0
    %839 = vdwg.mxu0
    %840 = vmatprep.subr.bf16.mxu0 %v622
    %841 = vmatpush1.bf16.msra.mxu0 %v621
    %842 = vmatprep.subr.bf16.mxu0 %v620
    %843 = vmatpush1.bf16.msra.mxu0 %v619
    %844 = vmatprep.subr.bf16.mxu0 %v618
    %845 = vmatpush1.bf16.msra.mxu0 %v617
    %846 = vmatprep.subr.bf16.mxu0 %v616
    %847 = vmatpush1.bf16.msra.mxu0 %v615
    %848 = vmatprep.subr.bf16.mxu0 %v614
    %849 = vmatpush1.bf16.msra.mxu0 %v613
    %850 = vmatprep.subr.bf16.mxu0 %v612
    %851 = vmatpush1.bf16.msra.mxu0 %v611
    %852 = vmatprep.subr.bf16.mxu0 %v610
    %853 = vmatpush1.bf16.msra.mxu0 %v609
    %854 = vmatprep.subr.bf16.mxu0 %v608
    %855 = vmatpush1.bf16.msra.mxu0 %v607
    %856 = vmatprep.subr.bf16.mxu0 %v638
    %857 = vmatpush2.bf16.msra.mxu0 %v637
    %858 = vmatprep.subr.bf16.mxu0 %v636
    %859 = vmatpush2.bf16.msra.mxu0 %v635
    %860 = vmatprep.subr.bf16.mxu0 %v634
    %861 = vmatpush2.bf16.msra.mxu0 %v633
    %862 = vmatprep.subr.bf16.mxu0 %v632
    %863 = vmatpush2.bf16.msra.mxu0 %v631
    %864 = vmatprep.subr.bf16.mxu0 %v630
    %865 = vmatpush2.bf16.msra.mxu0 %v629
    %866 = vmatprep.subr.bf16.mxu0 %v628
    %867 = vmatpush2.bf16.msra.mxu0 %v627
    %868 = vmatprep.subr.bf16.mxu0 %v626
    %869 = vmatpush2.bf16.msra.mxu0 %v625
    %870 = vmatprep.subr.bf16.mxu0 %v624
    %871 = vmatpush2.bf16.msra.mxu0 %v623
    %872 = vmatprep.mubr.bf16.mxu0 %v228
    %873 = vmatmul.mubr.bf16.gmra.mxu0 %v227
    %v874 = vpop.f32.mrf.mxu0
    %v875 = vadd.f32 %v834, %v874
    %v876 = vpop.f32.mrf.mxu0
    %v877 = vadd.f32 %v836, %v876
    %v878 = vpop.f32.mrf.mxu0
    %v879 = vpop.f32.mrf.mxu0
    %880 = vdwg.mxu0
    %881 = vmatprep.subr.bf16.mxu0 %v654
    %882 = vmatpush1.bf16.msra.mxu0 %v653
    %883 = vmatprep.subr.bf16.mxu0 %v652
    %884 = vmatpush1.bf16.msra.mxu0 %v651
    %885 = vmatprep.subr.bf16.mxu0 %v650
    %886 = vmatpush1.bf16.msra.mxu0 %v649
    %887 = vmatprep.subr.bf16.mxu0 %v648
    %888 = vmatpush1.bf16.msra.mxu0 %v647
    %889 = vmatprep.subr.bf16.mxu0 %v646
    %890 = vmatpush1.bf16.msra.mxu0 %v645
    %891 = vmatprep.subr.bf16.mxu0 %v644
    %892 = vmatpush1.bf16.msra.mxu0 %v643
    %893 = vmatprep.subr.bf16.mxu0 %v642
    %894 = vmatpush1.bf16.msra.mxu0 %v641
    %895 = vmatprep.subr.bf16.mxu0 %v640
    %896 = vmatpush1.bf16.msra.mxu0 %v639
    %897 = vmatprep.subr.bf16.mxu0 %v670
    %898 = vmatpush2.bf16.msra.mxu0 %v669
    %899 = vmatprep.subr.bf16.mxu0 %v668
    %900 = vmatpush2.bf16.msra.mxu0 %v667
    %901 = vmatprep.subr.bf16.mxu0 %v666
    %902 = vmatpush2.bf16.msra.mxu0 %v665
    %903 = vmatprep.subr.bf16.mxu0 %v664
    %904 = vmatpush2.bf16.msra.mxu0 %v663
    %905 = vmatprep.subr.bf16.mxu0 %v662
    %906 = vmatpush2.bf16.msra.mxu0 %v661
    %907 = vmatprep.subr.bf16.mxu0 %v660
    %908 = vmatpush2.bf16.msra.mxu0 %v659
    %909 = vmatprep.subr.bf16.mxu0 %v658
    %910 = vmatpush2.bf16.msra.mxu0 %v657
    %911 = vmatprep.subr.bf16.mxu0 %v656
    %912 = vmatpush2.bf16.msra.mxu0 %v655
    %913 = vmatprep.mubr.bf16.mxu0 %v230
    %914 = vmatmul.mubr.bf16.gmra.mxu0 %v229
    %v915 = vpop.f32.mrf.mxu0
    %v916 = vadd.f32 %v875, %v915
    %v917 = vpop.f32.mrf.mxu0
    %v918 = vadd.f32 %v877, %v917
    %v919 = vpop.f32.mrf.mxu0
    %v920 = vpop.f32.mrf.mxu0
    %921 = vdwg.mxu0
    %922 = vmatprep.subr.bf16.mxu0 %v686
    %923 = vmatpush1.bf16.msra.mxu0 %v685
    %924 = vmatprep.subr.bf16.mxu0 %v684
    %925 = vmatpush1.bf16.msra.mxu0 %v683
    %926 = vmatprep.subr.bf16.mxu0 %v682
    %927 = vmatpush1.bf16.msra.mxu0 %v681
    %928 = vmatprep.subr.bf16.mxu0 %v680
    %929 = vmatpush1.bf16.msra.mxu0 %v679
    %930 = vmatprep.subr.bf16.mxu0 %v678
    %931 = vmatpush1.bf16.msra.mxu0 %v677
    %932 = vmatprep.subr.bf16.mxu0 %v676
    %933 = vmatpush1.bf16.msra.mxu0 %v675
    %934 = vmatprep.subr.bf16.mxu0 %v674
    %935 = vmatpush1.bf16.msra.mxu0 %v673
    %936 = vmatprep.subr.bf16.mxu0 %v672
    %937 = vmatpush1.bf16.msra.mxu0 %v671
    %938 = vmatprep.subr.bf16.mxu0 0
    %939 = vmatpush2.bf16.msra.mxu0 0
    %940 = vmatprep.subr.bf16.mxu0 0
    %941 = vmatpush2.bf16.msra.mxu0 0
    %942 = vmatprep.subr.bf16.mxu0 0
    %943 = vmatpush2.bf16.msra.mxu0 0
    %944 = vmatprep.subr.bf16.mxu0 0
    %945 = vmatpush2.bf16.msra.mxu0 0
    %946 = vmatprep.subr.bf16.mxu0 0
    %947 = vmatpush2.bf16.msra.mxu0 0
    %948 = vmatprep.subr.bf16.mxu0 0
    %949 = vmatpush2.bf16.msra.mxu0 0
    %950 = vmatprep.subr.bf16.mxu0 0
    %951 = vmatpush2.bf16.msra.mxu0 0
    %952 = vmatprep.subr.bf16.mxu0 0
    %953 = vmatpush2.bf16.msra.mxu0 0
    %954 = vmatprep.mubr.bf16.mxu0 0
    %955 = vmatmul.mubr.bf16.gmra.mxu0 %v231
    %v956 = vpop.f32.mrf.mxu0
    %v957 = vadd.f32 %v916, %v956
    %v958 = vpop.f32.mrf.mxu0
    %v959 = vadd.f32 %v918, %v958
    %v960 = vpop.f32.mrf.mxu0
    %v961 = vpop.f32.mrf.mxu0
    %962 = vdwg.mxu0
    %v963 = vmax.f32 %v957, 0.0
    %v964 = vmax.f32 %v959, 0.0
    %v965 = vpack.c.bf16 %v963, %v963
    %v966 = vpack.c.bf16 %v964, %v964
    %v967 = vld [vmem:[%s4] sm:$0xf]
    %v968 = vld [vmem:[%s4 + $0x4] sm:$0xf]
    %v969 = vld [vmem:[%s4 + $0x8] sm:$0xf]
    %v970 = vld [vmem:[%s4 + $0xc] sm:$0xf]
    %v971 = vld [vmem:[%s4 + $0x10] sm:$0xf]
    %v972 = vld [vmem:[%s4 + $0x14] sm:$0xf]
    %v973 = vld [vmem:[%s4 + $0x18] sm:$0xf]
    %v974 = vld [vmem:[%s4 + $0x1c] sm:$0xf]
    %v975 = vld [vmem:[%s4 + $0x20] sm:$0xf]
    %v976 = vld [vmem:[%s4 + $0x24] sm:$0xf]
    %v977 = vld [vmem:[%s4 + $0x28] sm:$0xf]
    %v978 = vld [vmem:[%s4 + $0x2c] sm:$0xf]
    %v979 = vld [vmem:[%s4 + $0x30] sm:$0xf]
    %v980 = vld [vmem:[%s4 + $0x34] sm:$0xf]
    %v981 = vld [vmem:[%s4 + $0x38] sm:$0xf]
    %v982 = vld [vmem:[%s4 + $0x3c] sm:$0xf]
    %v983 = vld [vmem:[%s4 + $0x40] sm:$0xf]
    %v984 = vld [vmem:[%s4 + $0x44] sm:$0xf]
    %v985 = vld [vmem:[%s4 + $0x48] sm:$0xf]
    %v986 = vld [vmem:[%s4 + $0x4c] sm:$0xf]
    %v987 = vld [vmem:[%s4 + $0x50] sm:$0xf]
    %v988 = vld [vmem:[%s4 + $0x54] sm:$0xf]
    %v989 = vld [vmem:[%s4 + $0x58] sm:$0xf]
    %v990 = vld [vmem:[%s4 + $0x5c] sm:$0xf]
    %v991 = vld [vmem:[%s4 + $0x60] sm:$0xf]
    %v992 = vld [vmem:[%s4 + $0x64] sm:$0xf]
    %v993 = vld [vmem:[%s4 + $0x68] sm:$0xf]
    %v994 = vld [vmem:[%s4 + $0x6c] sm:$0xf]
    %v995 = vld [vmem:[%s4 + $0x70] sm:$0xf]
    %v996 = vld [vmem:[%s4 + $0x74] sm:$0xf]
    %v997 = vld [vmem:[%s4 + $0x78] sm:$0xf]
    %v998 = vld [vmem:[%s4 + $0x7c] sm:$0xf]
    %v999 = vld [vmem:[%s5] sm:$0x1]
    %v1001 = vlaneseq
    %v1002 = vshrl.u32 %v1001, 7
    %v1003 = vsub.s32 0, %v1002
    %v1004 = vrot.slane %v999, %v1003
    %v1038 = vunpack.c.l.b16 %v967
    %v1039 = vunpack.c.l.b16 %v968
    %v1040 = vunpack.c.l.b16 %v969
    %v1041 = vunpack.c.l.b16 %v970
    %v1042 = vunpack.c.l.b16 %v971
    %v1043 = vunpack.c.l.b16 %v972
    %v1044 = vunpack.c.l.b16 %v973
    %v1045 = vunpack.c.l.b16 %v974
    %v1046 = vunpack.c.l.b16 %v975
    %v1047 = vunpack.c.l.b16 %v976
    %v1048 = vunpack.c.l.b16 %v977
    %v1049 = vunpack.c.l.b16 %v978
    %v1050 = vunpack.c.l.b16 %v979
    %v1051 = vunpack.c.l.b16 %v980
    %v1052 = vunpack.c.l.b16 %v981
    %v1053 = vunpack.c.l.b16 %v982
    %v1054 = vunpack.c.l.b16 %v983
    %v1055 = vunpack.c.l.b16 %v984
    %v1056 = vunpack.c.l.b16 %v985
    %v1057 = vunpack.c.l.b16 %v986
    %v1058 = vunpack.c.l.b16 %v987
    %v1059 = vunpack.c.l.b16 %v988
    %v1060 = vunpack.c.l.b16 %v989
    %v1061 = vunpack.c.l.b16 %v990
    %v1062 = vunpack.c.l.b16 %v991
    %v1063 = vunpack.c.l.b16 %v992
    %v1064 = vunpack.c.l.b16 %v993
    %v1065 = vunpack.c.l.b16 %v994
    %v1066 = vunpack.c.l.b16 %v995
    %v1067 = vunpack.c.l.b16 %v996
    %v1068 = vunpack.c.l.b16 %v997
    %v1069 = vunpack.c.l.b16 %v998
    %v1070 = vpack.c.b16 %v1039, %v1038
    %v1071 = vpack.c.b16 %v1041, %v1040
    %v1072 = vpack.c.b16 %v1043, %v1042
    %v1073 = vpack.c.b16 %v1045, %v1044
    %v1074 = vpack.c.b16 %v1047, %v1046
    %v1075 = vpack.c.b16 %v1049, %v1048
    %v1076 = vpack.c.b16 %v1051, %v1050
    %v1077 = vpack.c.b16 %v1053, %v1052
    %v1078 = vpack.c.b16 %v1055, %v1054
    %v1079 = vpack.c.b16 %v1057, %v1056
    %v1080 = vpack.c.b16 %v1059, %v1058
    %v1081 = vpack.c.b16 %v1061, %v1060
    %v1082 = vpack.c.b16 %v1063, %v1062
    %v1083 = vpack.c.b16 %v1065, %v1064
    %v1084 = vpack.c.b16 %v1067, %v1066
    %v1085 = vpack.c.b16 %v1069, %v1068
    %1102 = vmatprep.subr.bf16.mxu0 0
    %1103 = vmatpush1.bf16.msra.mxu0 %v1077
    %1104 = vmatprep.subr.bf16.mxu0 0
    %1105 = vmatpush1.bf16.msra.mxu0 %v1076
    %1106 = vmatprep.subr.bf16.mxu0 0
    %1107 = vmatpush1.bf16.msra.mxu0 %v1075
    %1108 = vmatprep.subr.bf16.mxu0 0
    %1109 = vmatpush1.bf16.msra.mxu0 %v1074
    %1110 = vmatprep.subr.bf16.mxu0 0
    %1111 = vmatpush1.bf16.msra.mxu0 %v1073
    %1112 = vmatprep.subr.bf16.mxu0 0
    %1113 = vmatpush1.bf16.msra.mxu0 %v1072
    %1114 = vmatprep.subr.bf16.mxu0 0
    %1115 = vmatpush1.bf16.msra.mxu0 %v1071
    %1116 = vmatprep.subr.bf16.mxu0 0
    %1117 = vmatpush1.bf16.msra.mxu0 %v1070
    %1118 = vmatprep.subr.bf16.mxu0 0
    %1119 = vmatpush2.bf16.msra.mxu0 %v1085
    %1120 = vmatprep.subr.bf16.mxu0 0
    %1121 = vmatpush2.bf16.msra.mxu0 %v1084
    %1122 = vmatprep.subr.bf16.mxu0 0
    %1123 = vmatpush2.bf16.msra.mxu0 %v1083
    %1124 = vmatprep.subr.bf16.mxu0 0
    %1125 = vmatpush2.bf16.msra.mxu0 %v1082
    %1126 = vmatprep.subr.bf16.mxu0 0
    %1127 = vmatpush2.bf16.msra.mxu0 %v1081
    %1128 = vmatprep.subr.bf16.mxu0 0
    %1129 = vmatpush2.bf16.msra.mxu0 %v1080
    %1130 = vmatprep.subr.bf16.mxu0 0
    %1131 = vmatpush2.bf16.msra.mxu0 %v1079
    %1132 = vmatprep.subr.bf16.mxu0 0
    %1133 = vmatpush2.bf16.msra.mxu0 %v1078
    %1134 = vmatprep.mubr.bf16.mxu0 %v966
    %1135 = vmatmul.mubr.bf16.gmra.mxu0 %v965
    %v1136 = vpop.f32.mrf.mxu0
    %v1137 = vadd.f32 %v1004, %v1136
    %v1138 = vpop.f32.mrf.mxu0
    %v1139 = vpop.f32.mrf.mxu0
    %v1140 = vpop.f32.mrf.mxu0
    %1141 = vdwg.mxu0
    %v1142 = vmax.f32 %v1137, 0.0
    %v1143 = vpack.c.bf16 %v1142, %v1142
    %v1144 = vld [vmem:[%s6] sm:$0xf]
    %v1145 = vld [vmem:[%s6 + $0x4] sm:$0xf]
    %v1146 = vld [vmem:[%s6 + $0x8] sm:$0xf]
    %v1147 = vld [vmem:[%s6 + $0xc] sm:$0xf]
    %v1148 = vld [vmem:[%s6 + $0x10] sm:$0xf]
    %v1149 = vld [vmem:[%s6 + $0x14] sm:$0xf]
    %v1150 = vld [vmem:[%s6 + $0x18] sm:$0xf]
    %v1151 = vld [vmem:[%s6 + $0x1c] sm:$0xf]
    %v1152 = vld [vmem:[%s7] sm:$0x1]
    %v1154 = vlaneseq
    %v1155 = vshrl.u32 %v1154, 7
    %v1156 = vsub.s32 0, %v1155
    %v1157 = vrot.slane %v1152, %v1156
    %v1167 = vunpack.c.l.b16 %v1144
    %v1168 = vunpack.c.l.b16 %v1145
    %v1169 = vunpack.c.l.b16 %v1146
    %v1170 = vunpack.c.l.b16 %v1147
    %v1171 = vunpack.c.l.b16 %v1148
    %v1172 = vunpack.c.l.b16 %v1149
    %v1173 = vunpack.c.l.b16 %v1150
    %v1174 = vunpack.c.l.b16 %v1151
    %v1175 = vpack.c.b16 %v1168, %v1167
    %v1176 = vpack.c.b16 %v1170, %v1169
    %v1177 = vpack.c.b16 %v1172, %v1171
    %v1178 = vpack.c.b16 %v1174, %v1173
    %vm1183 = vcmask 523264
    %v1185 = vsel %vm1183, %v1143, 0
    %1187 = vmatprep.subr.bf16.mxu0 0
    %1188 = vmatpush1.bf16.msra.mxu0 0
    %1189 = vmatprep.subr.bf16.mxu0 0
    %1190 = vmatpush1.bf16.msra.mxu0 0
    %1191 = vmatprep.subr.bf16.mxu0 0
    %1192 = vmatpush1.bf16.msra.mxu0 0
    %1193 = vmatprep.subr.bf16.mxu0 0
    %1194 = vmatpush1.bf16.msra.mxu0 0
    %1195 = vmatprep.subr.bf16.mxu0 0
    %1196 = vmatpush1.bf16.msra.mxu0 %v1178
    %1197 = vmatprep.subr.bf16.mxu0 0
    %1198 = vmatpush1.bf16.msra.mxu0 %v1177
    %1199 = vmatprep.subr.bf16.mxu0 0
    %1200 = vmatpush1.bf16.msra.mxu0 %v1176
    %1201 = vmatprep.subr.bf16.mxu0 0
    %1202 = vmatpush1.bf16.msra.mxu0 %v1175
    %1203 = vmatprep.subr.bf16.mxu0 0
    %1204 = vmatpush2.bf16.msra.mxu0 0
    %1205 = vmatprep.subr.bf16.mxu0 0
    %1206 = vmatpush2.bf16.msra.mxu0 0
    %1207 = vmatprep.subr.bf16.mxu0 0
    %1208 = vmatpush2.bf16.msra.mxu0 0
    %1209 = vmatprep.subr.bf16.mxu0 0
    %1210 = vmatpush2.bf16.msra.mxu0 0
    %1211 = vmatprep.subr.bf16.mxu0 0
    %1212 = vmatpush2.bf16.msra.mxu0 0
    %1213 = vmatprep.subr.bf16.mxu0 0
    %1214 = vmatpush2.bf16.msra.mxu0 0
    %1215 = vmatprep.subr.bf16.mxu0 0
    %1216 = vmatpush2.bf16.msra.mxu0 0
    %1217 = vmatprep.subr.bf16.mxu0 0
    %1218 = vmatpush2.bf16.msra.mxu0 0
    %1219 = vmatprep.mubr.bf16.mxu0 0
    %1220 = vmatmul.mubr.bf16.gmra.mxu0 %v1185
    %v1221 = vpop.f32.mrf.mxu0
    %v1222 = vadd.f32 %v1157, %v1221
    %v1223 = vpop.f32.mrf.mxu0
    %v1224 = vpop.f32.mrf.mxu0
    %v1225 = vpop.f32.mrf.mxu0
    %1226 = vdwg.mxu0
    %v1227 = vmax.f32 %v1222, 0.0
    %v1228 = vld [vmem:[%s8] sm:$0xf]
    %v1229 = vld [vmem:[%s8 + $0x4] sm:$0xf]
    %v1230 = vld [vmem:[%s8 + $0x8] sm:$0xf]
    %v1231 = vld [vmem:[%s8 + $0xc] sm:$0xf]
    %v1232 = vld [vmem:[%s8 + $0x10] sm:$0xf]
    %v1233 = vld [vmem:[%s8 + $0x14] sm:$0xf]
    %v1234 = vld [vmem:[%s8 + $0x18] sm:$0xf]
    %v1235 = vld [vmem:[%s8 + $0x1c] sm:$0xf]
    %v1236 = vld [vmem:[%s9] sm:$0x1]
    %v1238 = vlaneseq
    %v1239 = vshrl.u32 %v1238, 7
    %v1240 = vsub.s32 0, %v1239
    %v1241 = vrot.slane %v1236, %v1240
    %v1251 = vunpack.c.l.b16 %v1228
    %v1252 = vunpack.c.l.b16 %v1229
    %v1253 = vunpack.c.l.b16 %v1230
    %v1254 = vunpack.c.l.b16 %v1231
    %v1255 = vunpack.c.l.b16 %v1232
    %v1256 = vunpack.c.l.b16 %v1233
    %v1257 = vunpack.c.l.b16 %v1234
    %v1258 = vunpack.c.l.b16 %v1235
    %v1259 = vpack.c.b16 %v1252, %v1251
    %v1260 = vpack.c.b16 %v1254, %v1253
    %v1261 = vpack.c.b16 %v1256, %v1255
    %v1262 = vpack.c.b16 %v1258, %v1257
    %1267 = vmatprep.subr.bf16.mxu0 0
    %1268 = vmatpush1.bf16.msra.mxu0 0
    %1269 = vmatprep.subr.bf16.mxu0 0
    %1270 = vmatpush1.bf16.msra.mxu0 0
    %1271 = vmatprep.subr.bf16.mxu0 0
    %1272 = vmatpush1.bf16.msra.mxu0 0
    %1273 = vmatprep.subr.bf16.mxu0 0
    %1274 = vmatpush1.bf16.msra.mxu0 0
    %1275 = vmatprep.subr.bf16.mxu0 0
    %1276 = vmatpush1.bf16.msra.mxu0 %v1262
    %1277 = vmatprep.subr.bf16.mxu0 0
    %1278 = vmatpush1.bf16.msra.mxu0 %v1261
    %1279 = vmatprep.subr.bf16.mxu0 0
    %1280 = vmatpush1.bf16.msra.mxu0 %v1260
    %1281 = vmatprep.subr.bf16.mxu0 0
    %1282 = vmatpush1.bf16.msra.mxu0 %v1259
    %1283 = vmatprep.subr.bf16.mxu0 0
    %1284 = vmatpush2.bf16.msra.mxu0 0
    %1285 = vmatprep.subr.bf16.mxu0 0
    %1286 = vmatpush2.bf16.msra.mxu0 0
    %1287 = vmatprep.subr.bf16.mxu0 0
    %1288 = vmatpush2.bf16.msra.mxu0 0
    %1289 = vmatprep.subr.bf16.mxu0 0
    %1290 = vmatpush2.bf16.msra.mxu0 0
    %1291 = vmatprep.subr.bf16.mxu0 0
    %1292 = vmatpush2.bf16.msra.mxu0 0
    %1293 = vmatprep.subr.bf16.mxu0 0
    %1294 = vmatpush2.bf16.msra.mxu0 0
    %1295 = vmatprep.subr.bf16.mxu0 0
    %1296 = vmatpush2.bf16.msra.mxu0 0
    %1297 = vmatprep.subr.bf16.mxu0 0
    %1298 = vmatpush2.bf16.msra.mxu0 0
    %1299 = vmatprep.mubr.bf16.mxu0 0
    %1300 = vmatmul.mubr.bf16.gmra.mxu0 %v1185
    %v1301 = vpop.f32.mrf.mxu0
    %v1302 = vadd.f32 %v1241, %v1301
    %v1303 = vpop.f32.mrf.mxu0
    %v1304 = vpop.f32.mrf.mxu0
    %v1305 = vpop.f32.mrf.mxu0
    %1306 = vdwg.mxu0
    %v1307 = vmax.f32 %v1302, 0.0
    %v1308 = vld [vmem:[%s1] sm:$0xff]
    %v1309 = vmul.f32 %v1307, %v1308
    %v1310 = vadd.f32 %v1227, %v1309
    %v1311 = vpack.c.bf16 %v1310, %v1310
    %v1312 = vld [vmem:[%s10] sm:$0xf]
    %v1313 = vld [vmem:[%s10 + $0x4] sm:$0xf]
    %v1314 = vld [vmem:[%s10 + $0x8] sm:$0xf]
    %v1315 = vld [vmem:[%s10 + $0xc] sm:$0xf]
    %v1316 = vld [vmem:[%s10 + $0x10] sm:$0xf]
    %v1317 = vld [vmem:[%s10 + $0x14] sm:$0xf]
    %v1318 = vld [vmem:[%s10 + $0x18] sm:$0xf]
    %v1319 = vld [vmem:[%s10 + $0x1c] sm:$0xf]
    %v1320 = vld [vmem:[%s10 + $0x20] sm:$0xf]
    %v1321 = vld [vmem:[%s10 + $0x24] sm:$0xf]
    %v1322 = vld [vmem:[%s10 + $0x28] sm:$0xf]
    %v1323 = vld [vmem:[%s10 + $0x2c] sm:$0xf]
    %v1324 = vld [vmem:[%s10 + $0x30] sm:$0xf]
    %v1325 = vld [vmem:[%s10 + $0x34] sm:$0xf]
    %v1326 = vld [vmem:[%s10 + $0x38] sm:$0xf]
    %v1327 = vld [vmem:[%s10 + $0x3c] sm:$0xf]
    %v1328 = vld [vmem:[%s11] sm:$0x1]
    %v1330 = vlaneseq
    %v1331 = vshrl.u32 %v1330, 7
    %v1332 = vsub.s32 0, %v1331
    %v1333 = vrot.slane %v1328, %v1332
    %v1351 = vunpack.c.l.b16 %v1312
    %v1352 = vunpack.c.l.b16 %v1313
    %v1353 = vunpack.c.l.b16 %v1314
    %v1354 = vunpack.c.l.b16 %v1315
    %v1355 = vunpack.c.l.b16 %v1316
    %v1356 = vunpack.c.l.b16 %v1317
    %v1357 = vunpack.c.l.b16 %v1318
    %v1358 = vunpack.c.l.b16 %v1319
    %v1359 = vunpack.c.l.b16 %v1320
    %v1360 = vunpack.c.l.b16 %v1321
    %v1361 = vunpack.c.l.b16 %v1322
    %v1362 = vunpack.c.l.b16 %v1323
    %v1363 = vunpack.c.l.b16 %v1324
    %v1364 = vunpack.c.l.b16 %v1325
    %v1365 = vunpack.c.l.b16 %v1326
    %v1366 = vunpack.c.l.b16 %v1327
    %v1367 = vpack.c.b16 %v1352, %v1351
    %v1368 = vpack.c.b16 %v1354, %v1353
    %v1369 = vpack.c.b16 %v1356, %v1355
    %v1370 = vpack.c.b16 %v1358, %v1357
    %v1371 = vpack.c.b16 %v1360, %v1359
    %v1372 = vpack.c.b16 %v1362, %v1361
    %v1373 = vpack.c.b16 %v1364, %v1363
    %v1374 = vpack.c.b16 %v1366, %v1365
    %1383 = vmatprep.subr.bf16.mxu0 0
    %1384 = vmatpush1.bf16.msra.mxu0 %v1374
    %1385 = vmatprep.subr.bf16.mxu0 0
    %1386 = vmatpush1.bf16.msra.mxu0 %v1373
    %1387 = vmatprep.subr.bf16.mxu0 0
    %1388 = vmatpush1.bf16.msra.mxu0 %v1372
    %1389 = vmatprep.subr.bf16.mxu0 0
    %1390 = vmatpush1.bf16.msra.mxu0 %v1371
    %1391 = vmatprep.subr.bf16.mxu0 0
    %1392 = vmatpush1.bf16.msra.mxu0 %v1370
    %1393 = vmatprep.subr.bf16.mxu0 0
    %1394 = vmatpush1.bf16.msra.mxu0 %v1369
    %1395 = vmatprep.subr.bf16.mxu0 0
    %1396 = vmatpush1.bf16.msra.mxu0 %v1368
    %1397 = vmatprep.subr.bf16.mxu0 0
    %1398 = vmatpush1.bf16.msra.mxu0 %v1367
    %1399 = vmatprep.subr.bf16.mxu0 0
    %1400 = vmatpush2.bf16.msra.mxu0 0
    %1401 = vmatprep.subr.bf16.mxu0 0
    %1402 = vmatpush2.bf16.msra.mxu0 0
    %1403 = vmatprep.subr.bf16.mxu0 0
    %1404 = vmatpush2.bf16.msra.mxu0 0
    %1405 = vmatprep.subr.bf16.mxu0 0
    %1406 = vmatpush2.bf16.msra.mxu0 0
    %1407 = vmatprep.subr.bf16.mxu0 0
    %1408 = vmatpush2.bf16.msra.mxu0 0
    %1409 = vmatprep.subr.bf16.mxu0 0
    %1410 = vmatpush2.bf16.msra.mxu0 0
    %1411 = vmatprep.subr.bf16.mxu0 0
    %1412 = vmatpush2.bf16.msra.mxu0 0
    %1413 = vmatprep.subr.bf16.mxu0 0
    %1414 = vmatpush2.bf16.msra.mxu0 0
    %1415 = vmatprep.mubr.bf16.mxu0 0
    %1416 = vmatmul.mubr.bf16.gmra.mxu0 %v1311
    %v1417 = vpop.f32.mrf.mxu0
    %v1418 = vadd.f32 %v1333, %v1417
    %v1419 = vpop.f32.mrf.mxu0
    %v1420 = vpop.f32.mrf.mxu0
    %v1421 = vpop.f32.mrf.mxu0
    %1422 = vdwg.mxu0
    %v1423 = vmax.f32 %v1418, 0.0
    %v1424 = vpack.c.bf16 %v1423, %v1423
    %v1425 = vld [vmem:[%s12] sm:$0xff]
    %v1426 = vld [vmem:[%s12 + $0x8] sm:$0xff]
    %v1427 = vld [vmem:[%s12 + $0x10] sm:$0xff]
    %v1428 = vld [vmem:[%s12 + $0x18] sm:$0xff]
    %v1429 = vld [vmem:[%s12 + $0x20] sm:$0xff]
    %v1430 = vld [vmem:[%s12 + $0x28] sm:$0xff]
    %v1431 = vld [vmem:[%s12 + $0x30] sm:$0xff]
    %v1432 = vld [vmem:[%s12 + $0x38] sm:$0xff]
    %v1433 = vld [vmem:[%s13] sm:$0x3]
    %v1435 = vlaneseq
    %v1436 = vshrl.u32 %v1435, 7
    %v1437 = vsub.s32 0, %v1436
    %v1438 = vrot.slane %v1433, %v1437
    %v1439 = vlaneseq
    %v1440 = vshrl.u32 %v1439, 7
    %v1441 = vsub.s32 1, %v1440
    %v1442 = vrot.slane %v1433, %v1441
    %v1453 = vunpack.c.l.b16 %v1425
    %v1454 = vunpack.c.h.b16 %v1425
    %v1455 = vunpack.c.l.b16 %v1426
    %v1456 = vunpack.c.h.b16 %v1426
    %v1457 = vunpack.c.l.b16 %v1427
    %v1458 = vunpack.c.h.b16 %v1427
    %v1459 = vunpack.c.l.b16 %v1428
    %v1460 = vunpack.c.h.b16 %v1428
    %v1461 = vunpack.c.l.b16 %v1429
    %v1462 = vunpack.c.h.b16 %v1429
    %v1463 = vunpack.c.l.b16 %v1430
    %v1464 = vunpack.c.h.b16 %v1430
    %v1465 = vunpack.c.l.b16 %v1431
    %v1466 = vunpack.c.h.b16 %v1431
    %v1467 = vunpack.c.l.b16 %v1432
    %v1468 = vunpack.c.h.b16 %v1432
    %v1469 = vpack.c.b16 %v1455, %v1453
    %v1470 = vpack.c.b16 %v1456, %v1454
    %v1471 = vpack.c.b16 %v1459, %v1457
    %v1472 = vpack.c.b16 %v1460, %v1458
    %v1473 = vpack.c.b16 %v1463, %v1461
    %v1474 = vpack.c.b16 %v1464, %v1462
    %v1475 = vpack.c.b16 %v1467, %v1465
    %v1476 = vpack.c.b16 %v1468, %v1466
    %v1486 = vsel %vm1183, %v1424, 0
    %1488 = vmatprep.subr.bf16.mxu0 0
    %1489 = vmatpush1.bf16.msra.mxu0 0
    %1490 = vmatprep.subr.bf16.mxu0 0
    %1491 = vmatpush1.bf16.msra.mxu0 0
    %1492 = vmatprep.subr.bf16.mxu0 0
    %1493 = vmatpush1.bf16.msra.mxu0 0
    %1494 = vmatprep.subr.bf16.mxu0 0
    %1495 = vmatpush1.bf16.msra.mxu0 0
    %1496 = vmatprep.subr.bf16.mxu0 %v1476
    %1497 = vmatpush1.bf16.msra.mxu0 %v1475
    %1498 = vmatprep.subr.bf16.mxu0 %v1474
    %1499 = vmatpush1.bf16.msra.mxu0 %v1473
    %1500 = vmatprep.subr.bf16.mxu0 %v1472
    %1501 = vmatpush1.bf16.msra.mxu0 %v1471
    %1502 = vmatprep.subr.bf16.mxu0 %v1470
    %1503 = vmatpush1.bf16.msra.mxu0 %v1469
    %1504 = vmatprep.subr.bf16.mxu0 0
    %1505 = vmatpush2.bf16.msra.mxu0 0
    %1506 = vmatprep.subr.bf16.mxu0 0
    %1507 = vmatpush2.bf16.msra.mxu0 0
    %1508 = vmatprep.subr.bf16.mxu0 0
    %1509 = vmatpush2.bf16.msra.mxu0 0
    %1510 = vmatprep.subr.bf16.mxu0 0
    %1511 = vmatpush2.bf16.msra.mxu0 0
    %1512 = vmatprep.subr.bf16.mxu0 0
    %1513 = vmatpush2.bf16.msra.mxu0 0
    %1514 = vmatprep.subr.bf16.mxu0 0
    %1515 = vmatpush2.bf16.msra.mxu0 0
    %1516 = vmatprep.subr.bf16.mxu0 0
    %1517 = vmatpush2.bf16.msra.mxu0 0
    %1518 = vmatprep.subr.bf16.mxu0 0
    %1519 = vmatpush2.bf16.msra.mxu0 0
    %1520 = vmatprep.mubr.bf16.mxu0 0
    %1521 = vmatmul.mubr.bf16.gmra.mxu0 %v1486
    %v1522 = vpop.f32.mrf.mxu0
    %v1523 = vadd.f32 %v1438, %v1522
    %v1524 = vpop.f32.mrf.mxu0
    %v1525 = vadd.f32 %v1442, %v1524
    %v1526 = vpop.f32.mrf.mxu0
    %v1527 = vpop.f32.mrf.mxu0
    %1528 = vdwg.mxu0
    %v1529 = vmax.f32 %v1523, 0.0
    %v1530 = vmax.f32 %v1525, 0.0
    %v1531 = vpack.c.bf16 %v1529, %v1529
    %v1532 = vpack.c.bf16 %v1530, %v1530
    %v1533 = vld [vmem:[#allocation5] sm:$0xff]
    %v1534 = vld [vmem:[#allocation5 + $0x8] sm:$0xff]
    %v1535 = vld [vmem:[#allocation5 + $0x10] sm:$0xff]
    %v1536 = vld [vmem:[#allocation5 + $0x18] sm:$0xf]
    %v1537 = vld [vmem:[#allocation5 + $0x1c] sm:$0xff]
    %v1538 = vld [vmem:[#allocation5 + $0x24] sm:$0xff]
    %v1539 = vld [vmem:[#allocation5 + $0x2c] sm:$0xff]
    %v1540 = vld [vmem:[#allocation5 + $0x34] sm:$0xf]
    %v1541 = vld [vmem:[#allocation5 + $0x38] sm:$0xff]
    %v1542 = vld [vmem:[#allocation5 + $0x40] sm:$0xff]
    %v1543 = vld [vmem:[#allocation5 + $0x48] sm:$0xff]
    %v1544 = vld [vmem:[#allocation5 + $0x50] sm:$0xf]
    %v1545 = vld [vmem:[#allocation5 + $0x54] sm:$0xff]
    %v1546 = vld [vmem:[#allocation5 + $0x5c] sm:$0xff]
    %v1547 = vld [vmem:[#allocation5 + $0x64] sm:$0xff]
    %v1548 = vld [vmem:[#allocation5 + $0x6c] sm:$0xf]
    %v1549 = vld [vmem:[#allocation5 + $0x70] sm:$0xff]
    %v1550 = vld [vmem:[#allocation5 + $0x78] sm:$0xff]
    %v1551 = vld [vmem:[#allocation5 + $0x80] sm:$0xff]
    %v1552 = vld [vmem:[#allocation5 + $0x88] sm:$0xf]
    %v1553 = vld [vmem:[#allocation5 + $0x8c] sm:$0xff]
    %v1554 = vld [vmem:[#allocation5 + $0x94] sm:$0xff]
    %v1555 = vld [vmem:[#allocation5 + $0x9c] sm:$0xff]
    %v1556 = vld [vmem:[#allocation5 + $0xa4] sm:$0xf]
    %v1557 = vld [vmem:[#allocation5 + $0xa8] sm:$0xff]
    %v1558 = vld [vmem:[#allocation5 + $0xb0] sm:$0xff]
    %v1559 = vld [vmem:[#allocation5 + $0xb8] sm:$0xff]
    %v1560 = vld [vmem:[#allocation5 + $0xc0] sm:$0xf]
    %v1561 = vld [vmem:[#allocation5 + $0xc4] sm:$0xff]
    %v1562 = vld [vmem:[#allocation5 + $0xcc] sm:$0xff]
    %v1563 = vld [vmem:[#allocation5 + $0xd4] sm:$0xff]
    %v1564 = vld [vmem:[#allocation5 + $0xdc] sm:$0xf]
    %v1565 = vld [vmem:[#allocation5 + $0xe0] sm:$0xff]
    %v1566 = vld [vmem:[#allocation5 + $0xe8] sm:$0xff]
    %v1567 = vld [vmem:[#allocation5 + $0xf0] sm:$0xff]
    %v1568 = vld [vmem:[#allocation5 + $0xf8] sm:$0xf]
    %v1569 = vld [vmem:[#allocation5 + $0xfc] sm:$0xff]
    %v1570 = vld [vmem:[#allocation5 + $0x104] sm:$0xff]
    %v1571 = vld [vmem:[#allocation5 + $0x10c] sm:$0xff]
    %v1572 = vld [vmem:[#allocation5 + $0x114] sm:$0xf]
    %v1573 = vld [vmem:[#allocation5 + $0x118] sm:$0xff]
    %v1574 = vld [vmem:[#allocation5 + $0x120] sm:$0xff]
    %v1575 = vld [vmem:[#allocation5 + $0x128] sm:$0xff]
    %v1576 = vld [vmem:[#allocation5 + $0x130] sm:$0xf]
    %v1577 = vld [vmem:[#allocation5 + $0x134] sm:$0xff]
    %v1578 = vld [vmem:[#allocation5 + $0x13c] sm:$0xff]
    %v1579 = vld [vmem:[#allocation5 + $0x144] sm:$0xff]
    %v1580 = vld [vmem:[#allocation5 + $0x14c] sm:$0xf]
    %v1581 = vld [vmem:[#allocation5 + $0x150] sm:$0xff]
    %v1582 = vld [vmem:[#allocation5 + $0x158] sm:$0xff]
    %v1583 = vld [vmem:[#allocation5 + $0x160] sm:$0xff]
    %v1584 = vld [vmem:[#allocation5 + $0x168] sm:$0xf]
    %v1585 = vld [vmem:[#allocation5 + $0x16c] sm:$0xff]
    %v1586 = vld [vmem:[#allocation5 + $0x174] sm:$0xff]
    %v1587 = vld [vmem:[#allocation5 + $0x17c] sm:$0xff]
    %v1588 = vld [vmem:[#allocation5 + $0x184] sm:$0xf]
    %v1589 = vld [vmem:[#allocation5 + $0x188] sm:$0xff]
    %v1590 = vld [vmem:[#allocation5 + $0x190] sm:$0xff]
    %v1591 = vld [vmem:[#allocation5 + $0x198] sm:$0xff]
    %v1592 = vld [vmem:[#allocation5 + $0x1a0] sm:$0xf]
    %v1593 = vld [vmem:[#allocation5 + $0x1a4] sm:$0xff]
    %v1594 = vld [vmem:[#allocation5 + $0x1ac] sm:$0xff]
    %v1595 = vld [vmem:[#allocation5 + $0x1b4] sm:$0xff]
    %v1596 = vld [vmem:[#allocation5 + $0x1bc] sm:$0xf]
    %v1597 = vld [vmem:[#allocation5 + $0x1c0] sm:$0xff]
    %v1598 = vld [vmem:[#allocation5 + $0x1c8] sm:$0xff]
    %v1599 = vld [vmem:[#allocation5 + $0x1d0] sm:$0xff]
    %v1600 = vld [vmem:[#allocation5 + $0x1d8] sm:$0xf]
    %v1601 = vld [vmem:[#allocation5 + $0x1dc] sm:$0xff]
    %v1602 = vld [vmem:[#allocation5 + $0x1e4] sm:$0xff]
    %v1603 = vld [vmem:[#allocation5 + $0x1ec] sm:$0xff]
    %v1604 = vld [vmem:[#allocation5 + $0x1f4] sm:$0xf]
    %v1605 = vld [vmem:[#allocation5 + $0x1f8] sm:$0xff]
    %v1606 = vld [vmem:[#allocation5 + $0x200] sm:$0xff]
    %v1607 = vld [vmem:[#allocation5 + $0x208] sm:$0xff]
    %v1608 = vld [vmem:[#allocation5 + $0x210] sm:$0xf]
    %v1609 = vld [vmem:[#allocation5 + $0x214] sm:$0xff]
    %v1610 = vld [vmem:[#allocation5 + $0x21c] sm:$0xff]
    %v1611 = vld [vmem:[#allocation5 + $0x224] sm:$0xff]
    %v1612 = vld [vmem:[#allocation5 + $0x22c] sm:$0xf]
    %v1613 = vld [vmem:[#allocation5 + $0x230] sm:$0xff]
    %v1614 = vld [vmem:[#allocation5 + $0x238] sm:$0xff]
    %v1615 = vld [vmem:[#allocation5 + $0x240] sm:$0xff]
    %v1616 = vld [vmem:[#allocation5 + $0x248] sm:$0xf]
    %v1617 = vld [vmem:[#allocation5 + $0x24c] sm:$0xff]
    %v1618 = vld [vmem:[#allocation5 + $0x254] sm:$0xff]
    %v1619 = vld [vmem:[#allocation5 + $0x25c] sm:$0xff]
    %v1620 = vld [vmem:[#allocation5 + $0x264] sm:$0xf]
    %v1621 = vld [vmem:[#allocation5 + $0x268] sm:$0xff]
    %v1622 = vld [vmem:[#allocation5 + $0x270] sm:$0xff]
    %v1623 = vld [vmem:[#allocation5 + $0x278] sm:$0xff]
    %v1624 = vld [vmem:[#allocation5 + $0x280] sm:$0xf]
    %v1625 = vld [vmem:[#allocation5 + $0x284] sm:$0xff]
    %v1626 = vld [vmem:[#allocation5 + $0x28c] sm:$0xff]
    %v1627 = vld [vmem:[#allocation5 + $0x294] sm:$0xff]
    %v1628 = vld [vmem:[#allocation5 + $0x29c] sm:$0xf]
    %v1629 = vld [vmem:[#allocation5 + $0x2a0] sm:$0xff]
    %v1630 = vld [vmem:[#allocation5 + $0x2a8] sm:$0xff]
    %v1631 = vld [vmem:[#allocation5 + $0x2b0] sm:$0xff]
    %v1632 = vld [vmem:[#allocation5 + $0x2b8] sm:$0xf]
    %v1633 = vld [vmem:[#allocation5 + $0x2bc] sm:$0xff]
    %v1634 = vld [vmem:[#allocation5 + $0x2c4] sm:$0xff]
    %v1635 = vld [vmem:[#allocation5 + $0x2cc] sm:$0xff]
    %v1636 = vld [vmem:[#allocation5 + $0x2d4] sm:$0xf]
    %v1637 = vld [vmem:[#allocation5 + $0x2d8] sm:$0xff]
    %v1638 = vld [vmem:[#allocation5 + $0x2e0] sm:$0xff]
    %v1639 = vld [vmem:[#allocation5 + $0x2e8] sm:$0xff]
    %v1640 = vld [vmem:[#allocation5 + $0x2f0] sm:$0xf]
    %v1641 = vld [vmem:[#allocation5 + $0x2f4] sm:$0xff]
    %v1642 = vld [vmem:[#allocation5 + $0x2fc] sm:$0xff]
    %v1643 = vld [vmem:[#allocation5 + $0x304] sm:$0xff]
    %v1644 = vld [vmem:[#allocation5 + $0x30c] sm:$0xf]
    %v1645 = vld [vmem:[#allocation5 + $0x310] sm:$0xff]
    %v1646 = vld [vmem:[#allocation5 + $0x318] sm:$0xff]
    %v1647 = vld [vmem:[#allocation5 + $0x320] sm:$0xff]
    %v1648 = vld [vmem:[#allocation5 + $0x328] sm:$0xf]
    %v1649 = vld [vmem:[#allocation5 + $0x32c] sm:$0xff]
    %v1650 = vld [vmem:[#allocation5 + $0x334] sm:$0xff]
    %v1651 = vld [vmem:[#allocation5 + $0x33c] sm:$0xff]
    %v1652 = vld [vmem:[#allocation5 + $0x344] sm:$0xf]
    %v1653 = vld [vmem:[#allocation5 + $0x348] sm:$0xff]
    %v1654 = vld [vmem:[#allocation5 + $0x350] sm:$0xff]
    %v1655 = vld [vmem:[#allocation5 + $0x358] sm:$0xff]
    %v1656 = vld [vmem:[#allocation5 + $0x360] sm:$0xf]
    %v1657 = vld [vmem:[#allocation5 + $0x364] sm:$0xff]
    %v1658 = vld [vmem:[#allocation5 + $0x36c] sm:$0xff]
    %v1659 = vld [vmem:[#allocation5 + $0x374] sm:$0xff]
    %v1660 = vld [vmem:[#allocation5 + $0x37c] sm:$0xf]
    %v1661 = vld [vmem:[%s15] sm:$0xff]
    %v1663 = vlaneseq
    %v1664 = vshrl.u32 %v1663, 7
    %v1665 = vsub.s32 0, %v1664
    %v1666 = vrot.slane %v1661, %v1665
    %v1667 = vlaneseq
    %v1668 = vshrl.u32 %v1667, 7
    %v1669 = vsub.s32 1, %v1668
    %v1670 = vrot.slane %v1661, %v1669
    %v1671 = vlaneseq
    %v1672 = vshrl.u32 %v1671, 7
    %v1673 = vsub.s32 2, %v1672
    %v1674 = vrot.slane %v1661, %v1673
    %v1675 = vlaneseq
    %v1676 = vshrl.u32 %v1675, 7
    %v1677 = vsub.s32 3, %v1676
    %v1678 = vrot.slane %v1661, %v1677
    %v1679 = vlaneseq
    %v1680 = vshrl.u32 %v1679, 7
    %v1681 = vsub.s32 4, %v1680
    %v1682 = vrot.slane %v1661, %v1681
    %v1683 = vlaneseq
    %v1684 = vshrl.u32 %v1683, 7
    %v1685 = vsub.s32 5, %v1684
    %v1686 = vrot.slane %v1661, %v1685
    %v1687 = vlaneseq
    %v1688 = vshrl.u32 %v1687, 7
    %v1689 = vsub.s32 6, %v1688
    %v1690 = vrot.slane %v1661, %v1689
    %v1826 = vunpack.c.l.b16 %v1533
    %v1827 = vunpack.c.h.b16 %v1533
    %v1828 = vunpack.c.l.b16 %v1534
    %v1829 = vunpack.c.h.b16 %v1534
    %v1830 = vunpack.c.l.b16 %v1535
    %v1831 = vunpack.c.h.b16 %v1535
    %v1832 = vunpack.c.l.b16 %v1536
    %v1833 = vunpack.c.l.b16 %v1537
    %v1834 = vunpack.c.h.b16 %v1537
    %v1835 = vunpack.c.l.b16 %v1538
    %v1836 = vunpack.c.h.b16 %v1538
    %v1837 = vunpack.c.l.b16 %v1539
    %v1838 = vunpack.c.h.b16 %v1539
    %v1839 = vunpack.c.l.b16 %v1540
    %v1840 = vunpack.c.l.b16 %v1541
    %v1841 = vunpack.c.h.b16 %v1541
    %v1842 = vunpack.c.l.b16 %v1542
    %v1843 = vunpack.c.h.b16 %v1542
    %v1844 = vunpack.c.l.b16 %v1543
    %v1845 = vunpack.c.h.b16 %v1543
    %v1846 = vunpack.c.l.b16 %v1544
    %v1847 = vunpack.c.l.b16 %v1545
    %v1848 = vunpack.c.h.b16 %v1545
    %v1849 = vunpack.c.l.b16 %v1546
    %v1850 = vunpack.c.h.b16 %v1546
    %v1851 = vunpack.c.l.b16 %v1547
    %v1852 = vunpack.c.h.b16 %v1547
    %v1853 = vunpack.c.l.b16 %v1548
    %v1854 = vunpack.c.l.b16 %v1549
    %v1855 = vunpack.c.h.b16 %v1549
    %v1856 = vunpack.c.l.b16 %v1550
    %v1857 = vunpack.c.h.b16 %v1550
    %v1858 = vunpack.c.l.b16 %v1551
    %v1859 = vunpack.c.h.b16 %v1551
    %v1860 = vunpack.c.l.b16 %v1552
    %v1861 = vunpack.c.l.b16 %v1553
    %v1862 = vunpack.c.h.b16 %v1553
    %v1863 = vunpack.c.l.b16 %v1554
    %v1864 = vunpack.c.h.b16 %v1554
    %v1865 = vunpack.c.l.b16 %v1555
    %v1866 = vunpack.c.h.b16 %v1555
    %v1867 = vunpack.c.l.b16 %v1556
    %v1868 = vunpack.c.l.b16 %v1557
    %v1869 = vunpack.c.h.b16 %v1557
    %v1870 = vunpack.c.l.b16 %v1558
    %v1871 = vunpack.c.h.b16 %v1558
    %v1872 = vunpack.c.l.b16 %v1559
    %v1873 = vunpack.c.h.b16 %v1559
    %v1874 = vunpack.c.l.b16 %v1560
    %v1875 = vunpack.c.l.b16 %v1561
    %v1876 = vunpack.c.h.b16 %v1561
    %v1877 = vunpack.c.l.b16 %v1562
    %v1878 = vunpack.c.h.b16 %v1562
    %v1879 = vunpack.c.l.b16 %v1563
    %v1880 = vunpack.c.h.b16 %v1563
    %v1881 = vunpack.c.l.b16 %v1564
    %v1882 = vunpack.c.l.b16 %v1565
    %v1883 = vunpack.c.h.b16 %v1565
    %v1884 = vunpack.c.l.b16 %v1566
    %v1885 = vunpack.c.h.b16 %v1566
    %v1886 = vunpack.c.l.b16 %v1567
    %v1887 = vunpack.c.h.b16 %v1567
    %v1888 = vunpack.c.l.b16 %v1568
    %v1889 = vunpack.c.l.b16 %v1569
    %v1890 = vunpack.c.h.b16 %v1569
    %v1891 = vunpack.c.l.b16 %v1570
    %v1892 = vunpack.c.h.b16 %v1570
    %v1893 = vunpack.c.l.b16 %v1571
    %v1894 = vunpack.c.h.b16 %v1571
    %v1895 = vunpack.c.l.b16 %v1572
    %v1896 = vunpack.c.l.b16 %v1573
    %v1897 = vunpack.c.h.b16 %v1573
    %v1898 = vunpack.c.l.b16 %v1574
    %v1899 = vunpack.c.h.b16 %v1574
    %v1900 = vunpack.c.l.b16 %v1575
    %v1901 = vunpack.c.h.b16 %v1575
    %v1902 = vunpack.c.l.b16 %v1576
    %v1903 = vunpack.c.l.b16 %v1577
    %v1904 = vunpack.c.h.b16 %v1577
    %v1905 = vunpack.c.l.b16 %v1578
    %v1906 = vunpack.c.h.b16 %v1578
    %v1907 = vunpack.c.l.b16 %v1579
    %v1908 = vunpack.c.h.b16 %v1579
    %v1909 = vunpack.c.l.b16 %v1580
    %v1910 = vunpack.c.l.b16 %v1581
    %v1911 = vunpack.c.h.b16 %v1581
    %v1912 = vunpack.c.l.b16 %v1582
    %v1913 = vunpack.c.h.b16 %v1582
    %v1914 = vunpack.c.l.b16 %v1583
    %v1915 = vunpack.c.h.b16 %v1583
    %v1916 = vunpack.c.l.b16 %v1584
    %v1917 = vunpack.c.l.b16 %v1585
    %v1918 = vunpack.c.h.b16 %v1585
    %v1919 = vunpack.c.l.b16 %v1586
    %v1920 = vunpack.c.h.b16 %v1586
    %v1921 = vunpack.c.l.b16 %v1587
    %v1922 = vunpack.c.h.b16 %v1587
    %v1923 = vunpack.c.l.b16 %v1588
    %v1924 = vunpack.c.l.b16 %v1589
    %v1925 = vunpack.c.h.b16 %v1589
    %v1926 = vunpack.c.l.b16 %v1590
    %v1927 = vunpack.c.h.b16 %v1590
    %v1928 = vunpack.c.l.b16 %v1591
    %v1929 = vunpack.c.h.b16 %v1591
    %v1930 = vunpack.c.l.b16 %v1592
    %v1931 = vunpack.c.l.b16 %v1593
    %v1932 = vunpack.c.h.b16 %v1593
    %v1933 = vunpack.c.l.b16 %v1594
    %v1934 = vunpack.c.h.b16 %v1594
    %v1935 = vunpack.c.l.b16 %v1595
    %v1936 = vunpack.c.h.b16 %v1595
    %v1937 = vunpack.c.l.b16 %v1596
    %v1938 = vunpack.c.l.b16 %v1597
    %v1939 = vunpack.c.h.b16 %v1597
    %v1940 = vunpack.c.l.b16 %v1598
    %v1941 = vunpack.c.h.b16 %v1598
    %v1942 = vunpack.c.l.b16 %v1599
    %v1943 = vunpack.c.h.b16 %v1599
    %v1944 = vunpack.c.l.b16 %v1600
    %v1945 = vunpack.c.l.b16 %v1601
    %v1946 = vunpack.c.h.b16 %v1601
    %v1947 = vunpack.c.l.b16 %v1602
    %v1948 = vunpack.c.h.b16 %v1602
    %v1949 = vunpack.c.l.b16 %v1603
    %v1950 = vunpack.c.h.b16 %v1603
    %v1951 = vunpack.c.l.b16 %v1604
    %v1952 = vunpack.c.l.b16 %v1605
    %v1953 = vunpack.c.h.b16 %v1605
    %v1954 = vunpack.c.l.b16 %v1606
    %v1955 = vunpack.c.h.b16 %v1606
    %v1956 = vunpack.c.l.b16 %v1607
    %v1957 = vunpack.c.h.b16 %v1607
    %v1958 = vunpack.c.l.b16 %v1608
    %v1959 = vunpack.c.l.b16 %v1609
    %v1960 = vunpack.c.h.b16 %v1609
    %v1961 = vunpack.c.l.b16 %v1610
    %v1962 = vunpack.c.h.b16 %v1610
    %v1963 = vunpack.c.l.b16 %v1611
    %v1964 = vunpack.c.h.b16 %v1611
    %v1965 = vunpack.c.l.b16 %v1612
    %v1966 = vunpack.c.l.b16 %v1613
    %v1967 = vunpack.c.h.b16 %v1613
    %v1968 = vunpack.c.l.b16 %v1614
    %v1969 = vunpack.c.h.b16 %v1614
    %v1970 = vunpack.c.l.b16 %v1615
    %v1971 = vunpack.c.h.b16 %v1615
    %v1972 = vunpack.c.l.b16 %v1616
    %v1973 = vunpack.c.l.b16 %v1617
    %v1974 = vunpack.c.h.b16 %v1617
    %v1975 = vunpack.c.l.b16 %v1618
    %v1976 = vunpack.c.h.b16 %v1618
    %v1977 = vunpack.c.l.b16 %v1619
    %v1978 = vunpack.c.h.b16 %v1619
    %v1979 = vunpack.c.l.b16 %v1620
    %v1980 = vunpack.c.l.b16 %v1621
    %v1981 = vunpack.c.h.b16 %v1621
    %v1982 = vunpack.c.l.b16 %v1622
    %v1983 = vunpack.c.h.b16 %v1622
    %v1984 = vunpack.c.l.b16 %v1623
    %v1985 = vunpack.c.h.b16 %v1623
    %v1986 = vunpack.c.l.b16 %v1624
    %v1987 = vunpack.c.l.b16 %v1625
    %v1988 = vunpack.c.h.b16 %v1625
    %v1989 = vunpack.c.l.b16 %v1626
    %v1990 = vunpack.c.h.b16 %v1626
    %v1991 = vunpack.c.l.b16 %v1627
    %v1992 = vunpack.c.h.b16 %v1627
    %v1993 = vunpack.c.l.b16 %v1628
    %v1994 = vunpack.c.l.b16 %v1629
    %v1995 = vunpack.c.h.b16 %v1629
    %v1996 = vunpack.c.l.b16 %v1630
    %v1997 = vunpack.c.h.b16 %v1630
    %v1998 = vunpack.c.l.b16 %v1631
    %v1999 = vunpack.c.h.b16 %v1631
    %v2000 = vunpack.c.l.b16 %v1632
    %v2001 = vunpack.c.l.b16 %v1633
    %v2002 = vunpack.c.h.b16 %v1633
    %v2003 = vunpack.c.l.b16 %v1634
    %v2004 = vunpack.c.h.b16 %v1634
    %v2005 = vunpack.c.l.b16 %v1635
    %v2006 = vunpack.c.h.b16 %v1635
    %v2007 = vunpack.c.l.b16 %v1636
    %v2008 = vunpack.c.l.b16 %v1637
    %v2009 = vunpack.c.h.b16 %v1637
    %v2010 = vunpack.c.l.b16 %v1638
    %v2011 = vunpack.c.h.b16 %v1638
    %v2012 = vunpack.c.l.b16 %v1639
    %v2013 = vunpack.c.h.b16 %v1639
    %v2014 = vunpack.c.l.b16 %v1640
    %v2015 = vunpack.c.l.b16 %v1641
    %v2016 = vunpack.c.h.b16 %v1641
    %v2017 = vunpack.c.l.b16 %v1642
    %v2018 = vunpack.c.h.b16 %v1642
    %v2019 = vunpack.c.l.b16 %v1643
    %v2020 = vunpack.c.h.b16 %v1643
    %v2021 = vunpack.c.l.b16 %v1644
    %v2022 = vunpack.c.l.b16 %v1645
    %v2023 = vunpack.c.h.b16 %v1645
    %v2024 = vunpack.c.l.b16 %v1646
    %v2025 = vunpack.c.h.b16 %v1646
    %v2026 = vunpack.c.l.b16 %v1647
    %v2027 = vunpack.c.h.b16 %v1647
    %v2028 = vunpack.c.l.b16 %v1648
    %v2029 = vunpack.c.l.b16 %v1649
    %v2030 = vunpack.c.h.b16 %v1649
    %v2031 = vunpack.c.l.b16 %v1650
    %v2032 = vunpack.c.h.b16 %v1650
    %v2033 = vunpack.c.l.b16 %v1651
    %v2034 = vunpack.c.h.b16 %v1651
    %v2035 = vunpack.c.l.b16 %v1652
    %v2036 = vunpack.c.l.b16 %v1653
    %v2037 = vunpack.c.h.b16 %v1653
    %v2038 = vunpack.c.l.b16 %v1654
    %v2039 = vunpack.c.h.b16 %v1654
    %v2040 = vunpack.c.l.b16 %v1655
    %v2041 = vunpack.c.h.b16 %v1655
    %v2042 = vunpack.c.l.b16 %v1656
    %v2043 = vunpack.c.l.b16 %v1657
    %v2044 = vunpack.c.h.b16 %v1657
    %v2045 = vunpack.c.l.b16 %v1658
    %v2046 = vunpack.c.h.b16 %v1658
    %v2047 = vunpack.c.l.b16 %v1659
    %v2048 = vunpack.c.h.b16 %v1659
    %v2049 = vunpack.c.l.b16 %v1660
    %v2050 = vpack.c.b16 %v1833, %v1826
    %v2051 = vpack.c.b16 %v1834, %v1827
    %v2052 = vpack.c.b16 %v1835, %v1828
    %v2053 = vpack.c.b16 %v1836, %v1829
    %v2054 = vpack.c.b16 %v1837, %v1830
    %v2055 = vpack.c.b16 %v1838, %v1831
    %v2056 = vpack.c.b16 %v1839, %v1832
    %v2057 = vpack.c.b16 %v1847, %v1840
    %v2058 = vpack.c.b16 %v1848, %v1841
    %v2059 = vpack.c.b16 %v1849, %v1842
    %v2060 = vpack.c.b16 %v1850, %v1843
    %v2061 = vpack.c.b16 %v1851, %v1844
    %v2062 = vpack.c.b16 %v1852, %v1845
    %v2063 = vpack.c.b16 %v1853, %v1846
    %v2064 = vpack.c.b16 %v1861, %v1854
    %v2065 = vpack.c.b16 %v1862, %v1855
    %v2066 = vpack.c.b16 %v1863, %v1856
    %v2067 = vpack.c.b16 %v1864, %v1857
    %v2068 = vpack.c.b16 %v1865, %v1858
    %v2069 = vpack.c.b16 %v1866, %v1859
    %v2070 = vpack.c.b16 %v1867, %v1860
    %v2071 = vpack.c.b16 %v1875, %v1868
    %v2072 = vpack.c.b16 %v1876, %v1869
    %v2073 = vpack.c.b16 %v1877, %v1870
    %v2074 = vpack.c.b16 %v1878, %v1871
    %v2075 = vpack.c.b16 %v1879, %v1872
    %v2076 = vpack.c.b16 %v1880, %v1873
    %v2077 = vpack.c.b16 %v1881, %v1874
    %v2078 = vpack.c.b16 %v1889, %v1882
    %v2079 = vpack.c.b16 %v1890, %v1883
    %v2080 = vpack.c.b16 %v1891, %v1884
    %v2081 = vpack.c.b16 %v1892, %v1885
    %v2082 = vpack.c.b16 %v1893, %v1886
    %v2083 = vpack.c.b16 %v1894, %v1887
    %v2084 = vpack.c.b16 %v1895, %v1888
    %v2085 = vpack.c.b16 %v1903, %v1896
    %v2086 = vpack.c.b16 %v1904, %v1897
    %v2087 = vpack.c.b16 %v1905, %v1898
    %v2088 = vpack.c.b16 %v1906, %v1899
    %v2089 = vpack.c.b16 %v1907, %v1900
    %v2090 = vpack.c.b16 %v1908, %v1901
    %v2091 = vpack.c.b16 %v1909, %v1902
    %v2092 = vpack.c.b16 %v1917, %v1910
    %v2093 = vpack.c.b16 %v1918, %v1911
    %v2094 = vpack.c.b16 %v1919, %v1912
    %v2095 = vpack.c.b16 %v1920, %v1913
    %v2096 = vpack.c.b16 %v1921, %v1914
    %v2097 = vpack.c.b16 %v1922, %v1915
    %v2098 = vpack.c.b16 %v1923, %v1916
    %v2099 = vpack.c.b16 %v1931, %v1924
    %v2100 = vpack.c.b16 %v1932, %v1925
    %v2101 = vpack.c.b16 %v1933, %v1926
    %v2102 = vpack.c.b16 %v1934, %v1927
    %v2103 = vpack.c.b16 %v1935, %v1928
    %v2104 = vpack.c.b16 %v1936, %v1929
    %v2105 = vpack.c.b16 %v1937, %v1930
    %v2106 = vpack.c.b16 %v1945, %v1938
    %v2107 = vpack.c.b16 %v1946, %v1939
    %v2108 = vpack.c.b16 %v1947, %v1940
    %v2109 = vpack.c.b16 %v1948, %v1941
    %v2110 = vpack.c.b16 %v1949, %v1942
    %v2111 = vpack.c.b16 %v1950, %v1943
    %v2112 = vpack.c.b16 %v1951, %v1944
    %v2113 = vpack.c.b16 %v1959, %v1952
    %v2114 = vpack.c.b16 %v1960, %v1953
    %v2115 = vpack.c.b16 %v1961, %v1954
    %v2116 = vpack.c.b16 %v1962, %v1955
    %v2117 = vpack.c.b16 %v1963, %v1956
    %v2118 = vpack.c.b16 %v1964, %v1957
    %v2119 = vpack.c.b16 %v1965, %v1958
    %v2120 = vpack.c.b16 %v1973, %v1966
    %v2121 = vpack.c.b16 %v1974, %v1967
    %v2122 = vpack.c.b16 %v1975, %v1968
    %v2123 = vpack.c.b16 %v1976, %v1969
    %v2124 = vpack.c.b16 %v1977, %v1970
    %v2125 = vpack.c.b16 %v1978, %v1971
    %v2126 = vpack.c.b16 %v1979, %v1972
    %v2127 = vpack.c.b16 %v1987, %v1980
    %v2128 = vpack.c.b16 %v1988, %v1981
    %v2129 = vpack.c.b16 %v1989, %v1982
    %v2130 = vpack.c.b16 %v1990, %v1983
    %v2131 = vpack.c.b16 %v1991, %v1984
    %v2132 = vpack.c.b16 %v1992, %v1985
    %v2133 = vpack.c.b16 %v1993, %v1986
    %v2134 = vpack.c.b16 %v2001, %v1994
    %v2135 = vpack.c.b16 %v2002, %v1995
    %v2136 = vpack.c.b16 %v2003, %v1996
    %v2137 = vpack.c.b16 %v2004, %v1997
    %v2138 = vpack.c.b16 %v2005, %v1998
    %v2139 = vpack.c.b16 %v2006, %v1999
    %v2140 = vpack.c.b16 %v2007, %v2000
    %v2141 = vpack.c.b16 %v2015, %v2008
    %v2142 = vpack.c.b16 %v2016, %v2009
    %v2143 = vpack.c.b16 %v2017, %v2010
    %v2144 = vpack.c.b16 %v2018, %v2011
    %v2145 = vpack.c.b16 %v2019, %v2012
    %v2146 = vpack.c.b16 %v2020, %v2013
    %v2147 = vpack.c.b16 %v2021, %v2014
    %v2148 = vpack.c.b16 %v2029, %v2022
    %v2149 = vpack.c.b16 %v2030, %v2023
    %v2150 = vpack.c.b16 %v2031, %v2024
    %v2151 = vpack.c.b16 %v2032, %v2025
    %v2152 = vpack.c.b16 %v2033, %v2026
    %v2153 = vpack.c.b16 %v2034, %v2027
    %v2154 = vpack.c.b16 %v2035, %v2028
    %v2155 = vpack.c.b16 %v2043, %v2036
    %v2156 = vpack.c.b16 %v2044, %v2037
    %v2157 = vpack.c.b16 %v2045, %v2038
    %v2158 = vpack.c.b16 %v2046, %v2039
    %v2159 = vpack.c.b16 %v2047, %v2040
    %v2160 = vpack.c.b16 %v2048, %v2041
    %v2161 = vpack.c.b16 %v2049, %v2042
    %2274 = vmatprep.subr.bf16.mxu0 %v2100
    %2275 = vmatpush1.bf16.msra.mxu0 %v2099
    %2276 = vmatprep.subr.bf16.mxu0 %v2093
    %2277 = vmatpush1.bf16.msra.mxu0 %v2092
    %2278 = vmatprep.subr.bf16.mxu0 %v2086
    %2279 = vmatpush1.bf16.msra.mxu0 %v2085
    %2280 = vmatprep.subr.bf16.mxu0 %v2079
    %2281 = vmatpush1.bf16.msra.mxu0 %v2078
    %2282 = vmatprep.subr.bf16.mxu0 %v2072
    %2283 = vmatpush1.bf16.msra.mxu0 %v2071
    %2284 = vmatprep.subr.bf16.mxu0 %v2065
    %2285 = vmatpush1.bf16.msra.mxu0 %v2064
    %2286 = vmatprep.subr.bf16.mxu0 %v2058
    %2287 = vmatpush1.bf16.msra.mxu0 %v2057
    %2288 = vmatprep.subr.bf16.mxu0 %v2051
    %2289 = vmatpush1.bf16.msra.mxu0 %v2050
    %2290 = vmatprep.subr.bf16.mxu0 %v2156
    %2291 = vmatpush2.bf16.msra.mxu0 %v2155
    %2292 = vmatprep.subr.bf16.mxu0 %v2149
    %2293 = vmatpush2.bf16.msra.mxu0 %v2148
    %2294 = vmatprep.subr.bf16.mxu0 %v2142
    %2295 = vmatpush2.bf16.msra.mxu0 %v2141
    %2296 = vmatprep.subr.bf16.mxu0 %v2135
    %2297 = vmatpush2.bf16.msra.mxu0 %v2134
    %2298 = vmatprep.subr.bf16.mxu0 %v2128
    %2299 = vmatpush2.bf16.msra.mxu0 %v2127
    %2300 = vmatprep.subr.bf16.mxu0 %v2121
    %2301 = vmatpush2.bf16.msra.mxu0 %v2120
    %2302 = vmatprep.subr.bf16.mxu0 %v2114
    %2303 = vmatpush2.bf16.msra.mxu0 %v2113
    %2304 = vmatprep.subr.bf16.mxu0 %v2107
    %2305 = vmatpush2.bf16.msra.mxu0 %v2106
    %2306 = vmatprep.mubr.bf16.mxu0 %v1532
    %2307 = vmatmul.mubr.bf16.gmra.mxu0 %v1531
    %v2308 = vpop.f32.mrf.mxu0
    %v2309 = vadd.f32 %v1666, %v2308
    %v2310 = vpop.f32.mrf.mxu0
    %v2311 = vadd.f32 %v1670, %v2310
    %v2312 = vpop.f32.mrf.mxu0
    %v2313 = vpop.f32.mrf.mxu0
    %2314 = vdwg.mxu0
    %2315 = vmatprep.subr.bf16.mxu0 %v2102
    %2316 = vmatpush1.bf16.msra.mxu0 %v2101
    %2317 = vmatprep.subr.bf16.mxu0 %v2095
    %2318 = vmatpush1.bf16.msra.mxu0 %v2094
    %2319 = vmatprep.subr.bf16.mxu0 %v2088
    %2320 = vmatpush1.bf16.msra.mxu0 %v2087
    %2321 = vmatprep.subr.bf16.mxu0 %v2081
    %2322 = vmatpush1.bf16.msra.mxu0 %v2080
    %2323 = vmatprep.subr.bf16.mxu0 %v2074
    %2324 = vmatpush1.bf16.msra.mxu0 %v2073
    %2325 = vmatprep.subr.bf16.mxu0 %v2067
    %2326 = vmatpush1.bf16.msra.mxu0 %v2066
    %2327 = vmatprep.subr.bf16.mxu0 %v2060
    %2328 = vmatpush1.bf16.msra.mxu0 %v2059
    %2329 = vmatprep.subr.bf16.mxu0 %v2053
    %2330 = vmatpush1.bf16.msra.mxu0 %v2052
    %2331 = vmatprep.subr.bf16.mxu0 %v2158
    %2332 = vmatpush2.bf16.msra.mxu0 %v2157
    %2333 = vmatprep.subr.bf16.mxu0 %v2151
    %2334 = vmatpush2.bf16.msra.mxu0 %v2150
    %2335 = vmatprep.subr.bf16.mxu0 %v2144
    %2336 = vmatpush2.bf16.msra.mxu0 %v2143
    %2337 = vmatprep.subr.bf16.mxu0 %v2137
    %2338 = vmatpush2.bf16.msra.mxu0 %v2136
    %2339 = vmatprep.subr.bf16.mxu0 %v2130
    %2340 = vmatpush2.bf16.msra.mxu0 %v2129
    %2341 = vmatprep.subr.bf16.mxu0 %v2123
    %2342 = vmatpush2.bf16.msra.mxu0 %v2122
    %2343 = vmatprep.subr.bf16.mxu0 %v2116
    %2344 = vmatpush2.bf16.msra.mxu0 %v2115
    %2345 = vmatprep.subr.bf16.mxu0 %v2109
    %2346 = vmatpush2.bf16.msra.mxu0 %v2108
    %2347 = vmatprep.mubr.bf16.mxu0 %v1532
    %2348 = vmatmul.mubr.bf16.gmra.mxu0 %v1531
    %v2349 = vpop.f32.mrf.mxu0
    %v2350 = vadd.f32 %v1674, %v2349
    %v2351 = vpop.f32.mrf.mxu0
    %v2352 = vadd.f32 %v1678, %v2351
    %v2353 = vpop.f32.mrf.mxu0
    %v2354 = vpop.f32.mrf.mxu0
    %2355 = vdwg.mxu0
    %2356 = vmatprep.subr.bf16.mxu0 %v2104
    %2357 = vmatpush1.bf16.msra.mxu0 %v2103
    %2358 = vmatprep.subr.bf16.mxu0 %v2097
    %2359 = vmatpush1.bf16.msra.mxu0 %v2096
    %2360 = vmatprep.subr.bf16.mxu0 %v2090
    %2361 = vmatpush1.bf16.msra.mxu0 %v2089
    %2362 = vmatprep.subr.bf16.mxu0 %v2083
    %2363 = vmatpush1.bf16.msra.mxu0 %v2082
    %2364 = vmatprep.subr.bf16.mxu0 %v2076
    %2365 = vmatpush1.bf16.msra.mxu0 %v2075
    %2366 = vmatprep.subr.bf16.mxu0 %v2069
    %2367 = vmatpush1.bf16.msra.mxu0 %v2068
    %2368 = vmatprep.subr.bf16.mxu0 %v2062
    %2369 = vmatpush1.bf16.msra.mxu0 %v2061
    %2370 = vmatprep.subr.bf16.mxu0 %v2055
    %2371 = vmatpush1.bf16.msra.mxu0 %v2054
    %2372 = vmatprep.subr.bf16.mxu0 %v2160
    %2373 = vmatpush2.bf16.msra.mxu0 %v2159
    %2374 = vmatprep.subr.bf16.mxu0 %v2153
    %2375 = vmatpush2.bf16.msra.mxu0 %v2152
    %2376 = vmatprep.subr.bf16.mxu0 %v2146
    %2377 = vmatpush2.bf16.msra.mxu0 %v2145
    %2378 = vmatprep.subr.bf16.mxu0 %v2139
    %2379 = vmatpush2.bf16.msra.mxu0 %v2138
    %2380 = vmatprep.subr.bf16.mxu0 %v2132
    %2381 = vmatpush2.bf16.msra.mxu0 %v2131
    %2382 = vmatprep.subr.bf16.mxu0 %v2125
    %2383 = vmatpush2.bf16.msra.mxu0 %v2124
    %2384 = vmatprep.subr.bf16.mxu0 %v2118
    %2385 = vmatpush2.bf16.msra.mxu0 %v2117
    %2386 = vmatprep.subr.bf16.mxu0 %v2111
    %2387 = vmatpush2.bf16.msra.mxu0 %v2110
    %2388 = vmatprep.mubr.bf16.mxu0 %v1532
    %2389 = vmatmul.mubr.bf16.gmra.mxu0 %v1531
    %v2390 = vpop.f32.mrf.mxu0
    %v2391 = vadd.f32 %v1682, %v2390
    %v2392 = vpop.f32.mrf.mxu0
    %v2393 = vadd.f32 %v1686, %v2392
    %v2394 = vpop.f32.mrf.mxu0
    %v2395 = vpop.f32.mrf.mxu0
    %2396 = vdwg.mxu0
    %2397 = vmatprep.subr.bf16.mxu0 0
    %2398 = vmatpush1.bf16.msra.mxu0 %v2105
    %2399 = vmatprep.subr.bf16.mxu0 0
    %2400 = vmatpush1.bf16.msra.mxu0 %v2098
    %2401 = vmatprep.subr.bf16.mxu0 0
    %2402 = vmatpush1.bf16.msra.mxu0 %v2091
    %2403 = vmatprep.subr.bf16.mxu0 0
    %2404 = vmatpush1.bf16.msra.mxu0 %v2084
    %2405 = vmatprep.subr.bf16.mxu0 0
    %2406 = vmatpush1.bf16.msra.mxu0 %v2077
    %2407 = vmatprep.subr.bf16.mxu0 0
    %2408 = vmatpush1.bf16.msra.mxu0 %v2070
    %2409 = vmatprep.subr.bf16.mxu0 0
    %2410 = vmatpush1.bf16.msra.mxu0 %v2063
    %2411 = vmatprep.subr.bf16.mxu0 0
    %2412 = vmatpush1.bf16.msra.mxu0 %v2056
    %2413 = vmatprep.subr.bf16.mxu0 0
    %2414 = vmatpush2.bf16.msra.mxu0 %v2161
    %2415 = vmatprep.subr.bf16.mxu0 0
    %2416 = vmatpush2.bf16.msra.mxu0 %v2154
    %2417 = vmatprep.subr.bf16.mxu0 0
    %2418 = vmatpush2.bf16.msra.mxu0 %v2147
    %2419 = vmatprep.subr.bf16.mxu0 0
    %2420 = vmatpush2.bf16.msra.mxu0 %v2140
    %2421 = vmatprep.subr.bf16.mxu0 0
    %2422 = vmatpush2.bf16.msra.mxu0 %v2133
    %2423 = vmatprep.subr.bf16.mxu0 0
    %2424 = vmatpush2.bf16.msra.mxu0 %v2126
    %2425 = vmatprep.subr.bf16.mxu0 0
    %2426 = vmatpush2.bf16.msra.mxu0 %v2119
    %2427 = vmatprep.subr.bf16.mxu0 0
    %2428 = vmatpush2.bf16.msra.mxu0 %v2112
    %2429 = vmatprep.mubr.bf16.mxu0 %v1532
    %2430 = vmatmul.mubr.bf16.gmra.mxu0 %v1531
    %v2431 = vpop.f32.mrf.mxu0
    %v2432 = vadd.f32 %v1690, %v2431
    %v2433 = vpop.f32.mrf.mxu0
    %v2434 = vpop.f32.mrf.mxu0
    %v2435 = vpop.f32.mrf.mxu0
    %2436 = vdwg.mxu0
    %v2437 = vxor.u32 %v2309, 2147483648
    %v2438 = vxor.u32 %v2311, 2147483648
    %v2439 = vxor.u32 %v2350, 2147483648
    %v2440 = vxor.u32 %v2352, 2147483648
    %v2441 = vxor.u32 %v2391, 2147483648
    %v2442 = vxor.u32 %v2393, 2147483648
    %v2443 = vxor.u32 %v2432, 2147483648
    %v2444 = vmul.f32 %v2437, 1.442695
    %v2445 = vpow.pop %v2444
    %v2446 = vmul.f32 %v2438, 1.442695
    %v2447 = vpow.pop %v2446
    %v2448 = vmul.f32 %v2439, 1.442695
    %v2449 = vpow.pop %v2448
    %v2450 = vmul.f32 %v2440, 1.442695
    %v2451 = vpow.pop %v2450
    %v2452 = vmul.f32 %v2441, 1.442695
    %v2453 = vpow.pop %v2452
    %v2454 = vmul.f32 %v2442, 1.442695
    %v2455 = vpow.pop %v2454
    %v2456 = vmul.f32 %v2443, 1.442695
    %v2457 = vpow.pop %v2456
    %v2458 = vadd.f32 %v2445, 1.0
    %v2459 = vadd.f32 %v2447, 1.0
    %v2460 = vadd.f32 %v2449, 1.0
    %v2461 = vadd.f32 %v2451, 1.0
    %v2462 = vadd.f32 %v2453, 1.0
    %v2463 = vadd.f32 %v2455, 1.0
    %v2464 = vadd.f32 %v2457, 1.0
    %v2465 = vrcp.pop %v2458
    %v2466 = vmul.f32 1.0, %v2465
    %v2467 = vrcp.pop %v2459
    %v2468 = vmul.f32 1.0, %v2467
    %v2469 = vrcp.pop %v2460
    %v2470 = vmul.f32 1.0, %v2469
    %v2471 = vrcp.pop %v2461
    %v2472 = vmul.f32 1.0, %v2471
    %v2473 = vrcp.pop %v2462
    %v2474 = vmul.f32 1.0, %v2473
    %v2475 = vrcp.pop %v2463
    %v2476 = vmul.f32 1.0, %v2475
    %v2477 = vrcp.pop %v2464
    %v2478 = vmul.f32 1.0, %v2477
    %2479 = vst [vmem:[#allocation7] sm:$0xff] %v2466
    %2480 = vst [vmem:[#allocation7 + $0x8] sm:$0xff] %v2468
    %2481 = vst [vmem:[#allocation7 + $0x10] sm:$0xff] %v2470
    %2482 = vst [vmem:[#allocation7 + $0x18] sm:$0xff] %v2472
    %2483 = vst [vmem:[#allocation7 + $0x20] sm:$0xff] %v2474
    %2484 = vst [vmem:[#allocation7 + $0x28] sm:$0xff] %v2476
    %2485 = vst [vmem:[#allocation7 + $0x30] sm:$0xff] %v2478
    %v2486 = vlaneseq
    %v2487 = vshrl.u32 %v2486, 7
    %v2488 = vlaneseq
    %v2489 = vand.u32 %v2488, 127
    %s2490 = smul.u32 0, 8
    %v2491 = vstv %s2490
    %v2492 = vadd.s32 %v2487, %v2491
    %vm2493 = vcmp.lt.s32.totalorder %v2492, 2
    %vm2494 = vcmp.lt.s32.totalorder %v2489, 10
    %vm2495 = vmand %vm2493, %vm2494
    %v2496 = vmul.f32 %v1307, %v1307
    %v2497 = vmul.f32 %v1227, %v1227
    %v2498 = vadd.f32 %v2497, %v2496
    %v2499 = vadd.f32 %v2496, 1e-08
    %v2500 = vlog2.pop %v2499
    %v2501 = vmul.f32 %v2500, 0.6931472
    %v2502 = vsub.f32 %v2498, %v2501
    %v2503 = vsub.f32 %v2502, 1.0
    %v2504 = vsel %vm2495, %v2503, 0.0
    %v2505 = vrot.slane %v2504, 4
    %v2506 = vadd.f32 %v2504, %v2505
    %v2507 = vrot.slane %v2506, 2
    %v2508 = vadd.f32 %v2506, %v2507
    %v2509 = vrot.slane %v2508, 1
    %v2510 = vadd.f32 %v2508, %v2509
    %2511 = vst [vmem:[#allocation8] sm:$0x1] %v2510
    // Predicated region
    $region74: #{tpu_custom_call.1} parent=1 // pred_check
      _
    $region75: #{tpu_custom_call.1} parent=1 // pred_check_branch
      %2513 = sbr.rel (0) target = $region77
    $region76: #{tpu_custom_call.1} parent=1 // pred_region
      %s2515 = ssub.s32 896, 896
      %2516 = vsyncadd [#allocation4], %s2515
      %s2518 = sshll.u32 [#allocation7], 4
      %s2519 = int_to_ptr.vmem [resolvable:$true] %s2518
      %2521 = dma.vmem_to_hbm [thread:$0]  %s2519, 896, %s16, [#allocation4]
    $region77: #{tpu_custom_call.1} parent=1 // pred_fallthru
      _
    // Predicated region
    $region78: #{tpu_custom_call.1} parent=1 // pred_check
      _
    $region79: #{tpu_custom_call.1} parent=1 // pred_check_branch
      %2523 = sbr.rel (0) target = $region81
    $region80: #{tpu_custom_call.1} parent=1 // pred_region
      %s2525 = ssub.s32 16, 16
      %2526 = vsyncadd [#allocation9], %s2525
      %s2528 = sshll.u32 [#allocation8], 4
      %s2529 = int_to_ptr.vmem [resolvable:$true] %s2528
      %2531 = dma.vmem_to_hbm [thread:$0]  %s2529, 16, %s17, [#allocation9]
    $region81: #{tpu_custom_call.1} parent=1 // pred_fallthru
      _
    // Predicated region
    $region82: #{tpu_custom_call.1} parent=1 // pred_check
      _
    $region83: #{tpu_custom_call.1} parent=1 // pred_check_branch
      %2533 = sbr.rel (0) target = $region85
    $region84: #{tpu_custom_call.1} parent=1 // pred_region
      %2534 = dma.done [#allocation4], 896
    $region85: #{tpu_custom_call.1} parent=1 // pred_fallthru
      _
    // Predicated region
    $region86: #{tpu_custom_call.1} parent=1 // pred_check
      _
    $region87: #{tpu_custom_call.1} parent=1 // pred_check_branch
      %2536 = sbr.rel (0) target = $region89
    $region88: #{tpu_custom_call.1} parent=1 // pred_region
      %2537 = dma.done [#allocation9], 16
    $region89: #{tpu_custom_call.1} parent=1 // pred_fallthru
      _
    %2538 = vsyncpa [#allocation3], 1
    %2539 = vsyncpa [#allocation6], 1
    %2540 = vsyncpa [#allocation4], 1
    %2541 = vsyncpa [#allocation9], 1

</llo_original>
